<compile_context>
chip_gen: v5e
topology: v5e:2x2
jax: 0.10.0
libtpu: 0.0.40
codegen_flags: <defaults>
</compile_context>

<pallas_src>
import functools

import jax
import jax.numpy as jnp
from jax import lax
from jax.experimental import pallas as pl
from jax.experimental.pallas import tpu as pltpu


def _mlp_kernel(n_linear, dx, reduce_last, x_ref, t_ref, *refs):
    """refs = (w0, b0, w1, b1, ..., wL, bL, out_ref).

    Feature-major MLP: activations are (features, tile_b).  Layer 0 fuses the
    concat([x, t]) on the VPU; hidden layers run on the MXU; a 1-row final
    layer is a VPU mul + cross-sublane reduce.
    """
    params, out_ref = refs[:-1], refs[-1]

    xr = x_ref[...]                      # (dx, tile_b)
    tr = t_ref[...]                      # (dt, tile_b)
    w0 = params[0][...]                  # (out0, dx+dt)  PyTorch [out, in]
    b0 = params[1][...]                  # (out0, 1)
    dt_ = w0.shape[1] - dx

    # Layer 0: fused concat([x, t]) -- no (N, dx+dt) array ever materialized.
    if dx == 1 and dt_ == 1:
        h = w0[:, 0:1] * xr + w0[:, 1:2] * tr + b0          # pure VPU
    else:
        h = (jnp.dot(w0[:, :dx], xr, preferred_element_type=jnp.float32)
             + jnp.dot(w0[:, dx:], tr, preferred_element_type=jnp.float32)
             + b0)
    if n_linear > 1:
        h = jnp.tanh(h)

    for i in range(1, n_linear):
        w = params[2 * i][...]
        b = params[2 * i + 1][...]       # (out_i, 1), broadcasts over batch lanes
        last = i == n_linear - 1
        if last and reduce_last:
            # Final (1, in) projection; weight passed pre-transposed as (in, 1):
            # broadcast-mul + sublane reduce instead of an M=1 MXU push.
            h = jnp.sum(w * h, axis=0, keepdims=True) + b
        else:
            h = jnp.dot(w, h, preferred_element_type=jnp.float32) + b
        if not last:
            h = jnp.tanh(h)

    out_ref[...] = h.astype(out_ref.dtype)


def _batch_tiling(N, max_tile=8192):
    """Pick (tile_b, N_pad) for (1, tile_b)-shaped batch blocks.

    tile_b must be a multiple of 128 (lane width) unless it equals the full
    (unpadded) batch.  Large batches get >= 2 grid steps so v7x's two
    TensorCores both get work; per-step working set stays a few MiB, well under
    v5e/v6e/v7x scoped-VMEM defaults.
    """
    if N % 128 != 0 and N <= max_tile:
        return N, N                       # single full-batch block (block == full dim)
    n_pad = ((N + 127) // 128) * 128
    tile = min(n_pad, max_tile)
    if n_pad >= 1024:                     # enough work to amortize a step split
        tile = min(tile, n_pad // 2)
    tile -= tile % 128
    tile = max(tile, 128)
    while n_pad % tile != 0:
        tile -= 128
    return tile, n_pad


def diffusion_pinn_forward(x, t, weights, biases, *, tile_b=None, max_tile=8192):
    """Equivalent of DiffusionPINN.forward(x, t): u = MLP(cat([x, t], dim=1)).

    weights[i]: PyTorch-layout (out_features, in_features); biases[i]: (out_features,).
    x: (N, dx), t: (N, dt); returns (N, d_out).
    """
    N, dx = x.shape
    dt = t.shape[1]
    n_linear = len(weights)
    d_out = weights[-1].shape[0]
    assert weights[0].shape[1] == dx + dt

    if tile_b is None:
        tile_b, n_pad = _batch_tiling(N, max_tile)
    else:
        n_pad = ((N + tile_b - 1) // tile_b) * tile_b
        assert tile_b == n_pad or tile_b % 128 == 0, "tile_b must be 128-aligned or cover the batch"

    # Feature-major inputs: (features, batch).  For (N,1) x/t this is a free reshape.
    xT = x.astype(jnp.float32).T
    tT = t.astype(jnp.float32).T
    if n_pad != N:
        xT = jnp.pad(xT, ((0, 0), (0, n_pad - N)))
        tT = jnp.pad(tT, ((0, 0), (0, n_pad - N)))

    reduce_last = n_linear > 1 and d_out == 1

    args = [xT, tT]
    in_specs = [pl.BlockSpec((dx, tile_b), lambda i: (0, i)),
                pl.BlockSpec((dt, tile_b), lambda i: (0, i))]
    for li, (w, b) in enumerate(zip(weights, biases)):
        w = jnp.asarray(w, jnp.float32)
        if reduce_last and li == n_linear - 1:
            w = w.T                       # (in, 1): kernel does mul+reduce, no in-kernel transpose
        b = jnp.asarray(b, jnp.float32).reshape(-1, 1)
        # Whole weight/bias resident in VMEM; index_map is grid-invariant.
        in_specs.append(pl.BlockSpec(w.shape, lambda i: (0, 0)))
        in_specs.append(pl.BlockSpec(b.shape, lambda i: (0, 0)))
        args += [w, b]

    out_specs = pl.BlockSpec((d_out, tile_b), lambda i: (0, i))

    u_row = pl.pallas_call(
        functools.partial(_mlp_kernel, n_linear, dx, reduce_last),
        out_shape=jax.ShapeDtypeStruct((d_out, n_pad), jnp.float32),
        grid_spec=pltpu.PrefetchScalarGridSpec(
            num_scalar_prefetch=0,
            grid=(n_pad // tile_b,),
            in_specs=in_specs,
            out_specs=out_specs,
        ),
        compiler_params=pltpu.CompilerParams(dimension_semantics=("parallel",)),
    )(*args)

    # (d_out, N) -> (N, d_out); for d_out == 1 this is a free reshape.
    return u_row[:, :N].T


def init_params(layers, key):
    """nn.Linear-style init, PyTorch [out, in] weight layout: U(-1/sqrt(fan_in), 1/sqrt(fan_in))."""
    weights, biases = [], []
    for i in range(len(layers) - 1):
        fan_in, fan_out = layers[i], layers[i + 1]
        key, kw, kb = jax.random.split(key, 3)
        bound = 1.0 / (fan_in ** 0.5)
        w = jax.random.uniform(kw, (fan_out, fan_in), jnp.float32, -bound, bound)
        b = jax.random.uniform(kb, (fan_out,), jnp.float32, -bound, bound)
        weights.append(w)
        biases.append(b)
    return weights, biases


def reference_forward(x, t, weights, biases):
    """Batch-major reference matching PyTorch semantics (x @ W.T + b), full-f32 matmuls."""
    h = jnp.concatenate([x, t], axis=1).astype(jnp.float32)
    for i, (w, b) in enumerate(zip(weights, biases)):
        h = jnp.dot(h, w.T, precision=lax.Precision.HIGHEST) + b
        if i < len(weights) - 1:
            h = jnp.tanh(h)
    return h


if __name__ == "__main__":
    # PINN with scalar x and scalar t inputs: layers = [2, 32, 32, 1].
    layers = [2, 32, 32, 1]
    N = 4096  # collocation points; auto tiling -> tile_b=2048, grid=(2,)

    key = jax.random.PRNGKey(0)
    key, kx, kt = jax.random.split(key, 3)
    x = jax.random.normal(kx, (N, 1), jnp.float32)
    t = jax.random.normal(kt, (N, 1), jnp.float32)

    weights, biases = init_params(layers, key)

    u = diffusion_pinn_forward(x, t, weights, biases)
    u = jax.block_until_ready(u)

    u_ref = reference_forward(x, t, weights, biases)
    assert u.shape == (N, 1)
    max_err = float(jnp.max(jnp.abs(u - u_ref)))
    assert jnp.allclose(u, u_ref, atol=1e-5, rtol=1e-5), f"mismatch vs JAX reference (max abs err {max_err})"

    print("KERNEL_OK")
</pallas_src>

<mosaic_0001>
module attributes {stable_mosaic.version = 11 : i64} {
  func.func @_mlp_kernel(%arg0: i32, %arg1: memref<1x2048xf32, #tpu.memory_space<vmem>>, %arg2: memref<1x2048xf32, #tpu.memory_space<vmem>>, %arg3: memref<32x2xf32, #tpu.memory_space<vmem>>, %arg4: memref<32x1xf32, #tpu.memory_space<vmem>>, %arg5: memref<32x32xf32, #tpu.memory_space<vmem>>, %arg6: memref<32x1xf32, #tpu.memory_space<vmem>>, %arg7: memref<32x1xf32, #tpu.memory_space<vmem>>, %arg8: memref<1x1xf32, #tpu.memory_space<vmem>>, %arg9: memref<1x2048xf32, #tpu.memory_space<vmem>>) attributes {dimension_semantics = [#tpu.dimension_semantics<parallel>], iteration_bounds = array<i64: 2>, scalar_prefetch = 0 : i64, scratch_operands = 0 : i64, tpu.core_type = #tpu.core_type<tc>, window_params = [{transform_indices = @transform_0, window_bounds = array<i64: 1, 2048>}, {transform_indices = @transform_1, window_bounds = array<i64: 1, 2048>}, {pipeline_mode = #tpu.pipeline_mode<synchronous>, transform_indices = @transform_2, window_bounds = array<i64: 32, 2>}, {pipeline_mode = #tpu.pipeline_mode<synchronous>, transform_indices = @transform_3, window_bounds = array<i64: 32, 1>}, {pipeline_mode = #tpu.pipeline_mode<synchronous>, transform_indices = @transform_4, window_bounds = array<i64: 32, 32>}, {pipeline_mode = #tpu.pipeline_mode<synchronous>, transform_indices = @transform_5, window_bounds = array<i64: 32, 1>}, {pipeline_mode = #tpu.pipeline_mode<synchronous>, transform_indices = @transform_6, window_bounds = array<i64: 32, 1>}, {pipeline_mode = #tpu.pipeline_mode<synchronous>, transform_indices = @transform_7, window_bounds = array<i64: 1, 1>}, {transform_indices = @transform_8, window_bounds = array<i64: 1, 2048>}]} {
    %c0 = arith.constant 0 : index
    %c0_0 = arith.constant 0 : index
    %0 = vector.load %arg1[%c0, %c0_0] : memref<1x2048xf32, #tpu.memory_space<vmem>>, vector<1x2048xf32>
    %c0_1 = arith.constant 0 : index
    %c0_2 = arith.constant 0 : index
    %1 = vector.load %arg2[%c0_1, %c0_2] : memref<1x2048xf32, #tpu.memory_space<vmem>>, vector<1x2048xf32>
    %c0_3 = arith.constant 0 : index
    %c0_4 = arith.constant 0 : index
    %2 = vector.load %arg3[%c0_3, %c0_4] : memref<32x2xf32, #tpu.memory_space<vmem>>, vector<32x2xf32>
    %c0_5 = arith.constant 0 : index
    %c0_6 = arith.constant 0 : index
    %3 = vector.load %arg4[%c0_5, %c0_6] : memref<32x1xf32, #tpu.memory_space<vmem>>, vector<32x1xf32>
    %4 = vector.extract_strided_slice %2 {offsets = [0, 0], sizes = [32, 1], strides = [1, 1]} : vector<32x2xf32> to vector<32x1xf32>
    %5 = vector.broadcast %4 : vector<32x1xf32> to vector<32x2048xf32>
    %6 = vector.broadcast %0 : vector<1x2048xf32> to vector<32x2048xf32>
    %7 = arith.mulf %5, %6 : vector<32x2048xf32>
    %8 = vector.extract_strided_slice %2 {offsets = [0, 1], sizes = [32, 1], strides = [1, 1]} : vector<32x2xf32> to vector<32x1xf32>
    %9 = vector.broadcast %8 : vector<32x1xf32> to vector<32x2048xf32>
    %10 = vector.broadcast %1 : vector<1x2048xf32> to vector<32x2048xf32>
    %11 = arith.mulf %9, %10 : vector<32x2048xf32>
    %12 = arith.addf %7, %11 : vector<32x2048xf32>
    %13 = vector.broadcast %3 : vector<32x1xf32> to vector<32x2048xf32>
    %14 = arith.addf %12, %13 : vector<32x2048xf32>
    %15 = math.tanh %14 : vector<32x2048xf32>
    %c0_7 = arith.constant 0 : index
    %c0_8 = arith.constant 0 : index
    %16 = vector.load %arg5[%c0_7, %c0_8] : memref<32x32xf32, #tpu.memory_space<vmem>>, vector<32x32xf32>
    %c0_9 = arith.constant 0 : index
    %c0_10 = arith.constant 0 : index
    %17 = vector.load %arg6[%c0_9, %c0_10] : memref<32x1xf32, #tpu.memory_space<vmem>>, vector<32x1xf32>
    %cst = arith.constant dense<0.000000e+00> : vector<32x2048xf32>
    %18 = tpu.matmul %16, %15, %cst {dimension_numbers = #tpu.dot_dimension_numbers<[1], [0], [0], [1], [0, 0, 1, 1], [], []>} : vector<32x32xf32>, vector<32x2048xf32>, vector<32x2048xf32> -> vector<32x2048xf32>
    %19 = vector.broadcast %17 : vector<32x1xf32> to vector<32x2048xf32>
    %20 = arith.addf %18, %19 : vector<32x2048xf32>
    %21 = math.tanh %20 : vector<32x2048xf32>
    %c0_11 = arith.constant 0 : index
    %c0_12 = arith.constant 0 : index
    %22 = vector.load %arg7[%c0_11, %c0_12] : memref<32x1xf32, #tpu.memory_space<vmem>>, vector<32x1xf32>
    %c0_13 = arith.constant 0 : index
    %c0_14 = arith.constant 0 : index
    %23 = vector.load %arg8[%c0_13, %c0_14] : memref<1x1xf32, #tpu.memory_space<vmem>>, vector<1x1xf32>
    %24 = vector.broadcast %22 : vector<32x1xf32> to vector<32x2048xf32>
    %25 = arith.mulf %24, %21 : vector<32x2048xf32>
    %cst_15 = arith.constant dense<0.000000e+00> : vector<2048xf32>
    %26 = vector.multi_reduction <add>, %25, %cst_15 [0] : vector<32x2048xf32> to vector<2048xf32>
    %27 = vector.shape_cast %26 : vector<2048xf32> to vector<1x2048xf32>
    %28 = vector.broadcast %23 : vector<1x1xf32> to vector<1x2048xf32>
    %29 = arith.addf %27, %28 : vector<1x2048xf32>
    %c0_16 = arith.constant 0 : index
    %c0_17 = arith.constant 0 : index
    %30 = vector.load %arg9[%c0_16, %c0_17] : memref<1x2048xf32, #tpu.memory_space<vmem>>, vector<1x2048xf32>
    tpu.vector_store %arg9[%c0_16, %c0_17], %29 {strides = array<i32>} : memref<1x2048xf32, #tpu.memory_space<vmem>>, vector<1x2048xf32>,
    return
  }
  func.func @transform_0(%arg0: i32) -> (i32, i32) {
    %c0_i32 = arith.constant 0 : i32
    %c0_i32_0 = arith.constant 0 : i32
    return %c0_i32, %arg0 : i32, i32
  }
  func.func @transform_1(%arg0: i32) -> (i32, i32) {
    %c0_i32 = arith.constant 0 : i32
    %c0_i32_0 = arith.constant 0 : i32
    return %c0_i32, %arg0 : i32, i32
  }
  func.func @transform_2(%arg0: i32) -> (i32, i32) {
    %c0_i32 = arith.constant 0 : i32
    %c0_i32_0 = arith.constant 0 : i32
    %c0_i32_1 = arith.constant 0 : i32
    return %c0_i32, %c0_i32_0 : i32, i32
  }
  func.func @transform_3(%arg0: i32) -> (i32, i32) {
    %c0_i32 = arith.constant 0 : i32
    %c0_i32_0 = arith.constant 0 : i32
    %c0_i32_1 = arith.constant 0 : i32
    return %c0_i32, %c0_i32_0 : i32, i32
  }
  func.func @transform_4(%arg0: i32) -> (i32, i32) {
    %c0_i32 = arith.constant 0 : i32
    %c0_i32_0 = arith.constant 0 : i32
    %c0_i32_1 = arith.constant 0 : i32
    return %c0_i32, %c0_i32_0 : i32, i32
  }
  func.func @transform_5(%arg0: i32) -> (i32, i32) {
    %c0_i32 = arith.constant 0 : i32
    %c0_i32_0 = arith.constant 0 : i32
    %c0_i32_1 = arith.constant 0 : i32
    return %c0_i32, %c0_i32_0 : i32, i32
  }
  func.func @transform_6(%arg0: i32) -> (i32, i32) {
    %c0_i32 = arith.constant 0 : i32
    %c0_i32_0 = arith.constant 0 : i32
    %c0_i32_1 = arith.constant 0 : i32
    return %c0_i32, %c0_i32_0 : i32, i32
  }
  func.func @transform_7(%arg0: i32) -> (i32, i32) {
    %c0_i32 = arith.constant 0 : i32
    %c0_i32_0 = arith.constant 0 : i32
    %c0_i32_1 = arith.constant 0 : i32
    return %c0_i32, %c0_i32_0 : i32, i32
  }
  func.func @transform_8(%arg0: i32) -> (i32, i32) {
    %c0_i32 = arith.constant 0 : i32
    %c0_i32_0 = arith.constant 0 : i32
    return %c0_i32, %arg0 : i32, i32
  }
}

</mosaic_0001>

<llo_original>
// kernel: tpu_custom_call.1
$region0: #{tpu_custom_call.1}
  #allocation0 [shape = 'u32[]', space=smem, size = 0x4, offset = 0x4, fixed_abs, tag = 'smem constant byte address 0x4 - core index']
  #allocation1 [shape = 'u32[72,128]{1,0:T(1,128)}', space=vmem, size = 0x9000, scoped, tag = 'internal scratch']
  #allocation2 [shape = 'f32[1,1]{1,0:T(1,128)S(1)}', space=vmem, size = 0x200, scoped, tag = 'scoped memory for tpu_custom_call.1']
  %s0 = inlined_call_operand.vmem [shape: f32[1,4096], index: 0, kind: input, shape index: {}]
  %s1 = inlined_call_operand.vmem [shape: f32[1,4096], index: 1, kind: input, shape index: {}]
  %s2 = inlined_call_operand.vmem [shape: f32[32,2], index: 2, kind: input, shape index: {}]
  %s3 = inlined_call_operand.vmem [shape: f32[32,1], index: 3, kind: input, shape index: {}]
  %s4 = inlined_call_operand.vmem [shape: f32[32,32], index: 4, kind: input, shape index: {}]
  %s5 = inlined_call_operand.vmem [shape: f32[32,1], index: 5, kind: input, shape index: {}]
  %s6 = inlined_call_operand.vmem [shape: f32[32,1], index: 6, kind: input, shape index: {}]
  %s7 = inlined_call_operand.<no memory space> [shape: f32[1,1], index: 7, kind: input, shape index: {}]
  %s8 = inlined_call_operand.hbm [shape: f32[1,4096], index: 8, kind: output, shape index: {}]
  %s9 = sld [smem:[#allocation0]]
  $region65: #{tpu_custom_call.1} parent=0
    _
  %s11 = ssub.s32 1, %s9
  %s12 = scalar_select 0, %s11, %s9
  %v13 = vstv %s7
  %14 = vst [vmem:[#allocation2] sm:$0x1] %v13
  $region1: #{tpu_custom_call.1} parent=0
    #allocation3 [shape = 'u8[16384]{0}', space=vmem, size = 0x4000, scoped, tag = 'output window, operand 0']
    #allocation4 [shape = 's32[2]{0}', space=sflag, size = 0x8, scoped, tag = 'scoped memory for tpu_custom_call.1']
    %15 = vsyncpa [#allocation4], 0
    %s16 = scalar_lea.sflag [#allocation4], 1
    %17 = vsyncpa %s16, 0
    loop: start=0, step=1, limit=4
    $region2: #{tpu_custom_call.1} parent=1 // loop_pre_header
      _
    $region3: #{tpu_custom_call.1} parent=1 // loop_header
      %s19 = sphi 0, %s23
      %p20 = scmp.ge.s32.totalorder %s19, 4
      %s29 = sphi 0, %s31
      %s32 = sphi 0, %s29
      %s33 = sphi 0, %s32
      %s49 = sphi 0, %s33
      %s55 = sphi 0, %s57
      %s58 = sphi 0, %s55
      %s59 = sphi 0, %s58
      %s75 = sphi 0, %s59
      %s79 = sphi 0, %s79
      %s81 = sphi 0, %s79
      %s82 = sphi 0, %s81
      %s96 = sphi 0, %s82
      %s100 = sphi 0, %s100
      %s102 = sphi 0, %s100
      %s103 = sphi 0, %s102
      %s117 = sphi 0, %s103
      %s121 = sphi 0, %s121
      %s123 = sphi 0, %s121
      %s124 = sphi 0, %s123
      %s138 = sphi 0, %s124
      %s142 = sphi 0, %s142
      %s144 = sphi 0, %s142
      %s145 = sphi 0, %s144
      %s159 = sphi 0, %s145
      %s163 = sphi 0, %s163
      %s165 = sphi 0, %s163
      %s166 = sphi 0, %s165
      %s180 = sphi 0, %s166
      %s184 = sphi 0, %s184
      %s186 = sphi 0, %s184
      %s187 = sphi 0, %s186
      %s201 = sphi 0, %s187
      %s207 = sphi 0, %s209
      %s210 = sphi 0, %s207
      %s211 = sphi 0, %s210
      %s227 = sphi 0, %s211
    $region4: #{tpu_custom_call.1} parent=1 // loop_header_branch
      %22 = sbr.rel (%p20) target = $region8
    $region5: #{tpu_custom_call.1} parent=1 // loop_body
      %s24 = ssub.s32 %s19, 1
      %s25 = ssub.s32 %s19, 2
      %s26 = sadd.s32 %s19, 1
      %s27 = ssub.s32 %s19, %s26
      %p28 = scmp.eq.s32.totalorder %s27, 0
      %s30 = sadd.s32 %s29, 1
      %s31 = scalar_select %p28, %s29, %s30
      %p34 = pneg %p28
      %p35 = scmp.eq.s32.totalorder %s19, 1
      %p36 = por %p34, %p35
      %p37 = scmp.ne.s32.totalorder %s29, %s32
      %p38 = scmp.eq.s32.totalorder %s19, 0
      %p39 = por %p37, %p38
      %p40 = scmp.ne.s32.totalorder %s29, %s32
      %p41 = scmp.eq.s32.totalorder %s24, 1
      %p42 = por %p40, %p41
      %p43 = scmp.ne.s32.totalorder %s32, %s33
      %p44 = scmp.eq.s32.totalorder %s24, 0
      %p45 = por %p43, %p44
      %p46 = scmp.ne.s32.totalorder %s32, %s33
      %p47 = scmp.eq.s32.totalorder %s25, 1
      %p48 = por %p46, %p47
      %p50 = scmp.ne.s32.totalorder %s33, %s49
      %p51 = scmp.eq.s32.totalorder %s25, 0
      %p52 = por %p50, %p51
      %s53 = ssub.s32 %s19, %s26
      %p54 = scmp.eq.s32.totalorder %s53, 0
      %s56 = sadd.s32 %s55, 1
      %s57 = scalar_select %p54, %s55, %s56
      %p60 = pneg %p54
      %p61 = scmp.eq.s32.totalorder %s19, 1
      %p62 = por %p60, %p61
      %p63 = scmp.ne.s32.totalorder %s55, %s58
      %p64 = scmp.eq.s32.totalorder %s19, 0
      %p65 = por %p63, %p64
      %p66 = scmp.ne.s32.totalorder %s55, %s58
      %p67 = scmp.eq.s32.totalorder %s24, 1
      %p68 = por %p66, %p67
      %p69 = scmp.ne.s32.totalorder %s58, %s59
      %p70 = scmp.eq.s32.totalorder %s24, 0
      %p71 = por %p69, %p70
      %p72 = scmp.ne.s32.totalorder %s58, %s59
      %p73 = scmp.eq.s32.totalorder %s25, 1
      %p74 = por %p72, %p73
      %p76 = scmp.ne.s32.totalorder %s59, %s75
      %p77 = scmp.eq.s32.totalorder %s25, 0
      %p78 = por %p76, %p77
      %s80 = sadd.s32 %s79, 1
      %p83 = scmp.eq.s32.totalorder %s19, 1
      %p84 = scmp.ne.s32.totalorder %s79, %s81
      %p85 = scmp.eq.s32.totalorder %s19, 0
      %p86 = por %p84, %p85
      %p87 = scmp.ne.s32.totalorder %s79, %s81
      %p88 = scmp.eq.s32.totalorder %s24, 1
      %p89 = por %p87, %p88
      %p90 = scmp.ne.s32.totalorder %s81, %s82
      %p91 = scmp.eq.s32.totalorder %s24, 0
      %p92 = por %p90, %p91
      %p93 = scmp.ne.s32.totalorder %s81, %s82
      %p94 = scmp.eq.s32.totalorder %s25, 1
      %p95 = por %p93, %p94
      %p97 = scmp.ne.s32.totalorder %s82, %s96
      %p98 = scmp.eq.s32.totalorder %s25, 0
      %p99 = por %p97, %p98
      %s101 = sadd.s32 %s100, 1
      %p104 = scmp.eq.s32.totalorder %s19, 1
      %p105 = scmp.ne.s32.totalorder %s100, %s102
      %p106 = scmp.eq.s32.totalorder %s19, 0
      %p107 = por %p105, %p106
      %p108 = scmp.ne.s32.totalorder %s100, %s102
      %p109 = scmp.eq.s32.totalorder %s24, 1
      %p110 = por %p108, %p109
      %p111 = scmp.ne.s32.totalorder %s102, %s103
      %p112 = scmp.eq.s32.totalorder %s24, 0
      %p113 = por %p111, %p112
      %p114 = scmp.ne.s32.totalorder %s102, %s103
      %p115 = scmp.eq.s32.totalorder %s25, 1
      %p116 = por %p114, %p115
      %p118 = scmp.ne.s32.totalorder %s103, %s117
      %p119 = scmp.eq.s32.totalorder %s25, 0
      %p120 = por %p118, %p119
      %s122 = sadd.s32 %s121, 1
      %p125 = scmp.eq.s32.totalorder %s19, 1
      %p126 = scmp.ne.s32.totalorder %s121, %s123
      %p127 = scmp.eq.s32.totalorder %s19, 0
      %p128 = por %p126, %p127
      %p129 = scmp.ne.s32.totalorder %s121, %s123
      %p130 = scmp.eq.s32.totalorder %s24, 1
      %p131 = por %p129, %p130
      %p132 = scmp.ne.s32.totalorder %s123, %s124
      %p133 = scmp.eq.s32.totalorder %s24, 0
      %p134 = por %p132, %p133
      %p135 = scmp.ne.s32.totalorder %s123, %s124
      %p136 = scmp.eq.s32.totalorder %s25, 1
      %p137 = por %p135, %p136
      %p139 = scmp.ne.s32.totalorder %s124, %s138
      %p140 = scmp.eq.s32.totalorder %s25, 0
      %p141 = por %p139, %p140
      %s143 = sadd.s32 %s142, 1
      %p146 = scmp.eq.s32.totalorder %s19, 1
      %p147 = scmp.ne.s32.totalorder %s142, %s144
      %p148 = scmp.eq.s32.totalorder %s19, 0
      %p149 = por %p147, %p148
      %p150 = scmp.ne.s32.totalorder %s142, %s144
      %p151 = scmp.eq.s32.totalorder %s24, 1
      %p152 = por %p150, %p151
      %p153 = scmp.ne.s32.totalorder %s144, %s145
      %p154 = scmp.eq.s32.totalorder %s24, 0
      %p155 = por %p153, %p154
      %p156 = scmp.ne.s32.totalorder %s144, %s145
      %p157 = scmp.eq.s32.totalorder %s25, 1
      %p158 = por %p156, %p157
      %p160 = scmp.ne.s32.totalorder %s145, %s159
      %p161 = scmp.eq.s32.totalorder %s25, 0
      %p162 = por %p160, %p161
      %s164 = sadd.s32 %s163, 1
      %p167 = scmp.eq.s32.totalorder %s19, 1
      %p168 = scmp.ne.s32.totalorder %s163, %s165
      %p169 = scmp.eq.s32.totalorder %s19, 0
      %p170 = por %p168, %p169
      %p171 = scmp.ne.s32.totalorder %s163, %s165
      %p172 = scmp.eq.s32.totalorder %s24, 1
      %p173 = por %p171, %p172
      %p174 = scmp.ne.s32.totalorder %s165, %s166
      %p175 = scmp.eq.s32.totalorder %s24, 0
      %p176 = por %p174, %p175
      %p177 = scmp.ne.s32.totalorder %s165, %s166
      %p178 = scmp.eq.s32.totalorder %s25, 1
      %p179 = por %p177, %p178
      %p181 = scmp.ne.s32.totalorder %s166, %s180
      %p182 = scmp.eq.s32.totalorder %s25, 0
      %p183 = por %p181, %p182
      %s185 = sadd.s32 %s184, 1
      %p188 = scmp.eq.s32.totalorder %s19, 1
      %p189 = scmp.ne.s32.totalorder %s184, %s186
      %p190 = scmp.eq.s32.totalorder %s19, 0
      %p191 = por %p189, %p190
      %p192 = scmp.ne.s32.totalorder %s184, %s186
      %p193 = scmp.eq.s32.totalorder %s24, 1
      %p194 = por %p192, %p193
      %p195 = scmp.ne.s32.totalorder %s186, %s187
      %p196 = scmp.eq.s32.totalorder %s24, 0
      %p197 = por %p195, %p196
      %p198 = scmp.ne.s32.totalorder %s186, %s187
      %p199 = scmp.eq.s32.totalorder %s25, 1
      %p200 = por %p198, %p199
      %p202 = scmp.ne.s32.totalorder %s187, %s201
      %p203 = scmp.eq.s32.totalorder %s25, 0
      %p204 = por %p202, %p203
      %s205 = ssub.s32 %s19, %s26
      %p206 = scmp.eq.s32.totalorder %s205, 0
      %s208 = sadd.s32 %s207, 1
      %s209 = scalar_select %p206, %s207, %s208
      %p212 = pneg %p206
      %p213 = scmp.eq.s32.totalorder %s19, 1
      %p214 = por %p212, %p213
      %p215 = scmp.ne.s32.totalorder %s207, %s210
      %p216 = scmp.eq.s32.totalorder %s19, 0
      %p217 = por %p215, %p216
      %p218 = scmp.ne.s32.totalorder %s207, %s210
      %p219 = scmp.eq.s32.totalorder %s24, 1
      %p220 = por %p218, %p219
      %p221 = scmp.ne.s32.totalorder %s210, %s211
      %p222 = scmp.eq.s32.totalorder %s24, 0
      %p223 = por %p221, %p222
      %p224 = scmp.ne.s32.totalorder %s210, %s211
      %p225 = scmp.eq.s32.totalorder %s25, 1
      %p226 = por %p224, %p225
      %p228 = scmp.ne.s32.totalorder %s211, %s227
      %p229 = scmp.eq.s32.totalorder %s25, 0
      %p230 = por %p228, %p229
      %p231 = scmp.le.s32.totalorder 1, %s19
      %p232 = scmp.lt.s32.totalorder %s19, 3
      %p233 = pnand %p231, %p232
      %p234 = pneg %p233
      // Predicated region
      $region9: #{tpu_custom_call.1} parent=5 // pred_check
        _
      $region10: #{tpu_custom_call.1} parent=5 // pred_check_branch
        %236 = sbr.rel (%p233) target = $region12
      $region11: #{tpu_custom_call.1} parent=5 // pred_region
        %s237 = ssub.s32 %s19, 1
        // Predicated region
        $region13: #{tpu_custom_call.1} parent=11 // pred_check
          %p238 = pneg %p92
        $region14: #{tpu_custom_call.1} parent=11 // pred_check_branch
          %240 = sbr.rel (%p238) target = $region16
        $region15: #{tpu_custom_call.1} parent=11 // pred_region
          _
        $region16: #{tpu_custom_call.1} parent=11 // pred_fallthru
          _
        // Predicated region
        $region17: #{tpu_custom_call.1} parent=11 // pred_check
          %p241 = pneg %p113
        $region18: #{tpu_custom_call.1} parent=11 // pred_check_branch
          %243 = sbr.rel (%p241) target = $region20
        $region19: #{tpu_custom_call.1} parent=11 // pred_region
          _
        $region20: #{tpu_custom_call.1} parent=11 // pred_fallthru
          _
        // Predicated region
        $region21: #{tpu_custom_call.1} parent=11 // pred_check
          %p244 = pneg %p134
        $region22: #{tpu_custom_call.1} parent=11 // pred_check_branch
          %246 = sbr.rel (%p244) target = $region24
        $region23: #{tpu_custom_call.1} parent=11 // pred_region
          _
        $region24: #{tpu_custom_call.1} parent=11 // pred_fallthru
          _
        // Predicated region
        $region25: #{tpu_custom_call.1} parent=11 // pred_check
          %p247 = pneg %p155
        $region26: #{tpu_custom_call.1} parent=11 // pred_check_branch
          %249 = sbr.rel (%p247) target = $region28
        $region27: #{tpu_custom_call.1} parent=11 // pred_region
          _
        $region28: #{tpu_custom_call.1} parent=11 // pred_fallthru
          _
        // Predicated region
        $region29: #{tpu_custom_call.1} parent=11 // pred_check
          %p250 = pneg %p176
        $region30: #{tpu_custom_call.1} parent=11 // pred_check_branch
          %252 = sbr.rel (%p250) target = $region32
        $region31: #{tpu_custom_call.1} parent=11 // pred_region
          _
        $region32: #{tpu_custom_call.1} parent=11 // pred_fallthru
          _
        // Predicated region
        $region33: #{tpu_custom_call.1} parent=11 // pred_check
          %p253 = pneg %p197
        $region34: #{tpu_custom_call.1} parent=11 // pred_check_branch
          %255 = sbr.rel (%p253) target = $region36
        $region35: #{tpu_custom_call.1} parent=11 // pred_region
          _
        $region36: #{tpu_custom_call.1} parent=11 // pred_fallthru
          _
      $region12: #{tpu_custom_call.1} parent=5 // pred_fallthru
        _
      %p256 = scmp.lt.s32.totalorder %s19, 2
      // Predicated region
      $region37: #{tpu_custom_call.1} parent=5 // pred_check
        %p257 = pneg %p256
      $region38: #{tpu_custom_call.1} parent=5 // pred_check_branch
        %259 = sbr.rel (%p257) target = $region40
      $region39: #{tpu_custom_call.1} parent=5 // pred_region
        // Predicated region
        $region41: #{tpu_custom_call.1} parent=39 // pred_check
          %p260 = pneg %p39
        $region42: #{tpu_custom_call.1} parent=39 // pred_check_branch
          %262 = sbr.rel (%p260) target = $region44
        $region43: #{tpu_custom_call.1} parent=39 // pred_region
          %s263 = smul.u32 16, %s19
          %p264 = scmp.lt.s32.totalorder %s263, 31
          %s265 = scalar_select %p264, %s263, 31
          %s266 = scalar_lea.vmem %s0, %s265
          %s267 = smul.u32 16, %s19
        $region44: #{tpu_custom_call.1} parent=39 // pred_fallthru
          _
        // Predicated region
        $region45: #{tpu_custom_call.1} parent=39 // pred_check
          %p268 = pneg %p65
        $region46: #{tpu_custom_call.1} parent=39 // pred_check_branch
          %270 = sbr.rel (%p268) target = $region48
        $region47: #{tpu_custom_call.1} parent=39 // pred_region
          %s271 = smul.u32 16, %s19
          %p272 = scmp.lt.s32.totalorder %s271, 31
          %s273 = scalar_select %p272, %s271, 31
          %s274 = scalar_lea.vmem %s1, %s273
          %s275 = smul.u32 16, %s19
        $region48: #{tpu_custom_call.1} parent=39 // pred_fallthru
          _
      $region40: #{tpu_custom_call.1} parent=5 // pred_fallthru
        _
      %p276 = scmp.le.s32.totalorder 1, %s19
      %p277 = scmp.lt.s32.totalorder %s19, 3
      %p278 = pnand %p276, %p277
      %p279 = pneg %p278
      // Predicated region
      $region49: #{tpu_custom_call.1} parent=5 // pred_check
        _
      $region50: #{tpu_custom_call.1} parent=5 // pred_check_branch
        %281 = sbr.rel (%p278) target = $region52
      $region51: #{tpu_custom_call.1} parent=5 // pred_region
        %s282 = ssub.s32 %s19, 1
        %s283 = smul.u32 16, %s24
        %p284 = scmp.lt.s32.totalorder %s283, 31
        %s285 = scalar_select %p284, %s283, 31
        %s286 = scalar_lea.vmem %s0, %s285
        %p287 = pneg %p45
        %p288 = pneg %p42
        %s289 = smul.u32 16, %s24
        %p290 = scmp.lt.s32.totalorder %s289, 31
        %s291 = scalar_select %p290, %s289, 31
        %s292 = scalar_lea.vmem %s1, %s291
        %p293 = pneg %p71
        %p294 = pneg %p68
        %p295 = pneg %p92
        %p296 = pneg %p89
        %p297 = pneg %p113
        %p298 = pneg %p110
        %p299 = pneg %p134
        %p300 = pneg %p131
        %p301 = pneg %p155
        %p302 = pneg %p152
        %p303 = pneg %p176
        %p304 = pneg %p173
        %p305 = pneg %p197
        %p306 = pneg %p194
        %p307 = pneg %p223
        %p308 = pneg %p220
        %s309 = sand.u32 %s210, 1
        %s310 = scalar_lea.sflag [#allocation4], %s309
        %s311 = sand.u32 %s210, 1
        %s312 = smul.addr %s311, 16
        %s313 = scalar_lea.vmem [#allocation3], %s312
        %s314 = smul.u32 16, %s24
        %p315 = scmp.lt.s32.totalorder %s314, 31
        %s316 = scalar_select %p315, %s314, 31
        %s317 = scalar_lea.vmem %s0, %s316
        %s318 = smul.u32 16, %s24
        %s319 = smul.u32 16, %s24
        %p320 = scmp.lt.s32.totalorder %s319, 31
        %s321 = scalar_select %p320, %s319, 31
        %s322 = scalar_lea.vmem %s1, %s321
        %s323 = smul.u32 16, %s24
        %s324 = smul.u32 16, %s24
        %v325 = vld [vmem:[%s317] sm:$0xff]
        %v326 = vld [vmem:[%s317 + $0x8] sm:$0xff]
        %v327 = vld [vmem:[%s322] sm:$0xff]
        %v328 = vld [vmem:[%s322 + $0x8] sm:$0xff]
        %v329 = vld [vmem:[%s2] sm:$0xff]
        %v330 = vld [vmem:[%s2 + $0x8] sm:$0xff]
        %v331 = vld [vmem:[%s2 + $0x10] sm:$0xff]
        %v332 = vld [vmem:[%s2 + $0x18] sm:$0xff]
        %v333 = vld [vmem:[%s3] sm:$0xff]
        %v334 = vld [vmem:[%s3 + $0x8] sm:$0xff]
        %v335 = vld [vmem:[%s3 + $0x10] sm:$0xff]
        %v336 = vld [vmem:[%s3 + $0x18] sm:$0xff]
        %338 = vset.pattern.permute.xlu0 0
        %339 = vperm.xlu0 %338, %v329
        %v340 = vpop.permute.xlu0 %339
        %343 = vset.pattern.permute.xlu0 0
        %344 = vperm.xlu0 %343, %v330
        %v345 = vpop.permute.xlu0 %344
        %348 = vset.pattern.permute.xlu0 0
        %349 = vperm.xlu0 %348, %v331
        %v350 = vpop.permute.xlu0 %349
        %353 = vset.pattern.permute.xlu0 0
        %354 = vperm.xlu0 %353, %v332
        %v355 = vpop.permute.xlu0 %354
        %v359 = vperm.slane %v325, 0
        %v360 = vperm.slane %v325, 1
        %v361 = vperm.slane %v325, 2
        %v362 = vperm.slane %v325, 3
        %v363 = vperm.slane %v325, 4
        %v364 = vperm.slane %v325, 5
        %v365 = vperm.slane %v325, 6
        %v366 = vperm.slane %v325, 7
        %v367 = vperm.slane %v326, 0
        %v368 = vperm.slane %v326, 1
        %v369 = vperm.slane %v326, 2
        %v370 = vperm.slane %v326, 3
        %v371 = vperm.slane %v326, 4
        %v372 = vperm.slane %v326, 5
        %v373 = vperm.slane %v326, 6
        %v374 = vperm.slane %v326, 7
        %v391 = vmul.f32 %v340, %v359
        %v392 = vmul.f32 %v340, %v360
        %v393 = vmul.f32 %v340, %v361
        %v394 = vmul.f32 %v340, %v362
        %v395 = vmul.f32 %v340, %v363
        %v396 = vmul.f32 %v340, %v364
        %v397 = vmul.f32 %v340, %v365
        %v398 = vmul.f32 %v340, %v366
        %v399 = vmul.f32 %v340, %v367
        %v400 = vmul.f32 %v340, %v368
        %v401 = vmul.f32 %v340, %v369
        %v402 = vmul.f32 %v340, %v370
        %v403 = vmul.f32 %v340, %v371
        %v404 = vmul.f32 %v340, %v372
        %v405 = vmul.f32 %v340, %v373
        %v406 = vmul.f32 %v340, %v374
        %v407 = vmul.f32 %v345, %v359
        %v408 = vmul.f32 %v345, %v360
        %v409 = vmul.f32 %v345, %v361
        %v410 = vmul.f32 %v345, %v362
        %v411 = vmul.f32 %v345, %v363
        %v412 = vmul.f32 %v345, %v364
        %v413 = vmul.f32 %v345, %v365
        %v414 = vmul.f32 %v345, %v366
        %v415 = vmul.f32 %v345, %v367
        %v416 = vmul.f32 %v345, %v368
        %v417 = vmul.f32 %v345, %v369
        %v418 = vmul.f32 %v345, %v370
        %v419 = vmul.f32 %v345, %v371
        %v420 = vmul.f32 %v345, %v372
        %v421 = vmul.f32 %v345, %v373
        %v422 = vmul.f32 %v345, %v374
        %v423 = vmul.f32 %v350, %v359
        %v424 = vmul.f32 %v350, %v360
        %v425 = vmul.f32 %v350, %v361
        %v426 = vmul.f32 %v350, %v362
        %v427 = vmul.f32 %v350, %v363
        %v428 = vmul.f32 %v350, %v364
        %v429 = vmul.f32 %v350, %v365
        %v430 = vmul.f32 %v350, %v366
        %v431 = vmul.f32 %v350, %v367
        %v432 = vmul.f32 %v350, %v368
        %v433 = vmul.f32 %v350, %v369
        %v434 = vmul.f32 %v350, %v370
        %v435 = vmul.f32 %v350, %v371
        %v436 = vmul.f32 %v350, %v372
        %v437 = vmul.f32 %v350, %v373
        %v438 = vmul.f32 %v350, %v374
        %v439 = vmul.f32 %v355, %v359
        %v440 = vmul.f32 %v355, %v360
        %v441 = vmul.f32 %v355, %v361
        %v442 = vmul.f32 %v355, %v362
        %v443 = vmul.f32 %v355, %v363
        %v444 = vmul.f32 %v355, %v364
        %v445 = vmul.f32 %v355, %v365
        %v446 = vmul.f32 %v355, %v366
        %v447 = vmul.f32 %v355, %v367
        %v448 = vmul.f32 %v355, %v368
        %v449 = vmul.f32 %v355, %v369
        %v450 = vmul.f32 %v355, %v370
        %v451 = vmul.f32 %v355, %v371
        %v452 = vmul.f32 %v355, %v372
        %v453 = vmul.f32 %v355, %v373
        %v454 = vmul.f32 %v355, %v374
        %455 = vset.pattern.permute.xlu0 1
        %456 = vperm.xlu0 %455, %v329
        %v457 = vpop.permute.xlu0 %456
        %459 = vset.pattern.permute.xlu0 1
        %460 = vperm.xlu0 %459, %v330
        %v461 = vpop.permute.xlu0 %460
        %463 = vset.pattern.permute.xlu0 1
        %464 = vperm.xlu0 %463, %v331
        %v465 = vpop.permute.xlu0 %464
        %467 = vset.pattern.permute.xlu0 1
        %468 = vperm.xlu0 %467, %v332
        %v469 = vpop.permute.xlu0 %468
        %v473 = vperm.slane %v327, 0
        %v474 = vperm.slane %v327, 1
        %v475 = vperm.slane %v327, 2
        %v476 = vperm.slane %v327, 3
        %v477 = vperm.slane %v327, 4
        %v478 = vperm.slane %v327, 5
        %v479 = vperm.slane %v327, 6
        %v480 = vperm.slane %v327, 7
        %v481 = vperm.slane %v328, 0
        %v482 = vperm.slane %v328, 1
        %v483 = vperm.slane %v328, 2
        %v484 = vperm.slane %v328, 3
        %v485 = vperm.slane %v328, 4
        %v486 = vperm.slane %v328, 5
        %v487 = vperm.slane %v328, 6
        %v488 = vperm.slane %v328, 7
        %v505 = vmul.f32 %v457, %v473
        %v506 = vmul.f32 %v457, %v474
        %v507 = vmul.f32 %v457, %v475
        %v508 = vmul.f32 %v457, %v476
        %v509 = vmul.f32 %v457, %v477
        %v510 = vmul.f32 %v457, %v478
        %v511 = vmul.f32 %v457, %v479
        %v512 = vmul.f32 %v457, %v480
        %v513 = vmul.f32 %v457, %v481
        %v514 = vmul.f32 %v457, %v482
        %v515 = vmul.f32 %v457, %v483
        %v516 = vmul.f32 %v457, %v484
        %v517 = vmul.f32 %v457, %v485
        %v518 = vmul.f32 %v457, %v486
        %v519 = vmul.f32 %v457, %v487
        %v520 = vmul.f32 %v457, %v488
        %v521 = vmul.f32 %v461, %v473
        %v522 = vmul.f32 %v461, %v474
        %v523 = vmul.f32 %v461, %v475
        %v524 = vmul.f32 %v461, %v476
        %v525 = vmul.f32 %v461, %v477
        %v526 = vmul.f32 %v461, %v478
        %v527 = vmul.f32 %v461, %v479
        %v528 = vmul.f32 %v461, %v480
        %v529 = vmul.f32 %v461, %v481
        %v530 = vmul.f32 %v461, %v482
        %v531 = vmul.f32 %v461, %v483
        %v532 = vmul.f32 %v461, %v484
        %v533 = vmul.f32 %v461, %v485
        %v534 = vmul.f32 %v461, %v486
        %v535 = vmul.f32 %v461, %v487
        %v536 = vmul.f32 %v461, %v488
        %v537 = vmul.f32 %v465, %v473
        %v538 = vmul.f32 %v465, %v474
        %v539 = vmul.f32 %v465, %v475
        %v540 = vmul.f32 %v465, %v476
        %v541 = vmul.f32 %v465, %v477
        %v542 = vmul.f32 %v465, %v478
        %v543 = vmul.f32 %v465, %v479
        %v544 = vmul.f32 %v465, %v480
        %v545 = vmul.f32 %v465, %v481
        %v546 = vmul.f32 %v465, %v482
        %v547 = vmul.f32 %v465, %v483
        %v548 = vmul.f32 %v465, %v484
        %v549 = vmul.f32 %v465, %v485
        %v550 = vmul.f32 %v465, %v486
        %v551 = vmul.f32 %v465, %v487
        %v552 = vmul.f32 %v465, %v488
        %v553 = vmul.f32 %v469, %v473
        %v554 = vmul.f32 %v469, %v474
        %v555 = vmul.f32 %v469, %v475
        %v556 = vmul.f32 %v469, %v476
        %v557 = vmul.f32 %v469, %v477
        %v558 = vmul.f32 %v469, %v478
        %v559 = vmul.f32 %v469, %v479
        %v560 = vmul.f32 %v469, %v480
        %v561 = vmul.f32 %v469, %v481
        %v562 = vmul.f32 %v469, %v482
        %v563 = vmul.f32 %v469, %v483
        %v564 = vmul.f32 %v469, %v484
        %v565 = vmul.f32 %v469, %v485
        %v566 = vmul.f32 %v469, %v486
        %v567 = vmul.f32 %v469, %v487
        %v568 = vmul.f32 %v469, %v488
        %v569 = vadd.f32 %v391, %v505
        %v570 = vadd.f32 %v392, %v506
        %v571 = vadd.f32 %v393, %v507
        %v572 = vadd.f32 %v394, %v508
        %v573 = vadd.f32 %v395, %v509
        %v574 = vadd.f32 %v396, %v510
        %v575 = vadd.f32 %v397, %v511
        %v576 = vadd.f32 %v398, %v512
        %v577 = vadd.f32 %v399, %v513
        %v578 = vadd.f32 %v400, %v514
        %v579 = vadd.f32 %v401, %v515
        %v580 = vadd.f32 %v402, %v516
        %v581 = vadd.f32 %v403, %v517
        %v582 = vadd.f32 %v404, %v518
        %v583 = vadd.f32 %v405, %v519
        %v584 = vadd.f32 %v406, %v520
        %v585 = vadd.f32 %v407, %v521
        %v586 = vadd.f32 %v408, %v522
        %v587 = vadd.f32 %v409, %v523
        %v588 = vadd.f32 %v410, %v524
        %v589 = vadd.f32 %v411, %v525
        %v590 = vadd.f32 %v412, %v526
        %v591 = vadd.f32 %v413, %v527
        %v592 = vadd.f32 %v414, %v528
        %v593 = vadd.f32 %v415, %v529
        %v594 = vadd.f32 %v416, %v530
        %v595 = vadd.f32 %v417, %v531
        %v596 = vadd.f32 %v418, %v532
        %v597 = vadd.f32 %v419, %v533
        %v598 = vadd.f32 %v420, %v534
        %v599 = vadd.f32 %v421, %v535
        %v600 = vadd.f32 %v422, %v536
        %v601 = vadd.f32 %v423, %v537
        %v602 = vadd.f32 %v424, %v538
        %v603 = vadd.f32 %v425, %v539
        %v604 = vadd.f32 %v426, %v540
        %v605 = vadd.f32 %v427, %v541
        %v606 = vadd.f32 %v428, %v542
        %v607 = vadd.f32 %v429, %v543
        %v608 = vadd.f32 %v430, %v544
        %v609 = vadd.f32 %v431, %v545
        %v610 = vadd.f32 %v432, %v546
        %v611 = vadd.f32 %v433, %v547
        %v612 = vadd.f32 %v434, %v548
        %v613 = vadd.f32 %v435, %v549
        %v614 = vadd.f32 %v436, %v550
        %v615 = vadd.f32 %v437, %v551
        %v616 = vadd.f32 %v438, %v552
        %v617 = vadd.f32 %v439, %v553
        %v618 = vadd.f32 %v440, %v554
        %v619 = vadd.f32 %v441, %v555
        %v620 = vadd.f32 %v442, %v556
        %v621 = vadd.f32 %v443, %v557
        %v622 = vadd.f32 %v444, %v558
        %v623 = vadd.f32 %v445, %v559
        %v624 = vadd.f32 %v446, %v560
        %v625 = vadd.f32 %v447, %v561
        %v626 = vadd.f32 %v448, %v562
        %v627 = vadd.f32 %v449, %v563
        %v628 = vadd.f32 %v450, %v564
        %v629 = vadd.f32 %v451, %v565
        %v630 = vadd.f32 %v452, %v566
        %v631 = vadd.f32 %v453, %v567
        %v632 = vadd.f32 %v454, %v568
        %634 = vset.pattern.permute.xlu0 0
        %635 = vperm.xlu0 %634, %v333
        %v636 = vpop.permute.xlu0 %635
        %639 = vset.pattern.permute.xlu0 0
        %640 = vperm.xlu0 %639, %v334
        %v641 = vpop.permute.xlu0 %640
        %644 = vset.pattern.permute.xlu0 0
        %645 = vperm.xlu0 %644, %v335
        %v646 = vpop.permute.xlu0 %645
        %649 = vset.pattern.permute.xlu0 0
        %650 = vperm.xlu0 %649, %v336
        %v651 = vpop.permute.xlu0 %650
        %v653 = vadd.f32 %v569, %v636
        %v654 = vadd.f32 %v570, %v636
        %v655 = vadd.f32 %v571, %v636
        %v656 = vadd.f32 %v572, %v636
        %v657 = vadd.f32 %v573, %v636
        %v658 = vadd.f32 %v574, %v636
        %v659 = vadd.f32 %v575, %v636
        %v660 = vadd.f32 %v576, %v636
        %v661 = vadd.f32 %v577, %v636
        %v662 = vadd.f32 %v578, %v636
        %v663 = vadd.f32 %v579, %v636
        %v664 = vadd.f32 %v580, %v636
        %v665 = vadd.f32 %v581, %v636
        %v666 = vadd.f32 %v582, %v636
        %v667 = vadd.f32 %v583, %v636
        %v668 = vadd.f32 %v584, %v636
        %v669 = vadd.f32 %v585, %v641
        %v670 = vadd.f32 %v586, %v641
        %v671 = vadd.f32 %v587, %v641
        %v672 = vadd.f32 %v588, %v641
        %v673 = vadd.f32 %v589, %v641
        %v674 = vadd.f32 %v590, %v641
        %v675 = vadd.f32 %v591, %v641
        %v676 = vadd.f32 %v592, %v641
        %v677 = vadd.f32 %v593, %v641
        %v678 = vadd.f32 %v594, %v641
        %v679 = vadd.f32 %v595, %v641
        %v680 = vadd.f32 %v596, %v641
        %v681 = vadd.f32 %v597, %v641
        %v682 = vadd.f32 %v598, %v641
        %v683 = vadd.f32 %v599, %v641
        %v684 = vadd.f32 %v600, %v641
        %v685 = vadd.f32 %v601, %v646
        %v686 = vadd.f32 %v602, %v646
        %v687 = vadd.f32 %v603, %v646
        %v688 = vadd.f32 %v604, %v646
        %v689 = vadd.f32 %v605, %v646
        %v690 = vadd.f32 %v606, %v646
        %v691 = vadd.f32 %v607, %v646
        %v692 = vadd.f32 %v608, %v646
        %v693 = vadd.f32 %v609, %v646
        %v694 = vadd.f32 %v610, %v646
        %v695 = vadd.f32 %v611, %v646
        %v696 = vadd.f32 %v612, %v646
        %v697 = vadd.f32 %v613, %v646
        %v698 = vadd.f32 %v614, %v646
        %v699 = vadd.f32 %v615, %v646
        %v700 = vadd.f32 %v616, %v646
        %v701 = vadd.f32 %v617, %v651
        %v702 = vadd.f32 %v618, %v651
        %v703 = vadd.f32 %v619, %v651
        %v704 = vadd.f32 %v620, %v651
        %v705 = vadd.f32 %v621, %v651
        %v706 = vadd.f32 %v622, %v651
        %v707 = vadd.f32 %v623, %v651
        %v708 = vadd.f32 %v624, %v651
        %v709 = vadd.f32 %v625, %v651
        %v710 = vadd.f32 %v626, %v651
        %v711 = vadd.f32 %v627, %v651
        %v712 = vadd.f32 %v628, %v651
        %v713 = vadd.f32 %v629, %v651
        %v714 = vadd.f32 %v630, %v651
        %v715 = vadd.f32 %v631, %v651
        %v716 = vadd.f32 %v632, %v651
        %v717 = vtanh.pop %v653
        %v718 = vtanh.pop %v654
        %v719 = vtanh.pop %v655
        %v720 = vtanh.pop %v656
        %v721 = vtanh.pop %v657
        %v722 = vtanh.pop %v658
        %v723 = vtanh.pop %v659
        %v724 = vtanh.pop %v660
        %v725 = vtanh.pop %v661
        %v726 = vtanh.pop %v662
        %v727 = vtanh.pop %v663
        %v728 = vtanh.pop %v664
        %v729 = vtanh.pop %v665
        %v730 = vtanh.pop %v666
        %v731 = vtanh.pop %v667
        %v732 = vtanh.pop %v668
        %v733 = vtanh.pop %v669
        %v734 = vtanh.pop %v670
        %v735 = vtanh.pop %v671
        %v736 = vtanh.pop %v672
        %v737 = vtanh.pop %v673
        %v738 = vtanh.pop %v674
        %v739 = vtanh.pop %v675
        %v740 = vtanh.pop %v676
        %v741 = vtanh.pop %v677
        %v742 = vtanh.pop %v678
        %v743 = vtanh.pop %v679
        %v744 = vtanh.pop %v680
        %v745 = vtanh.pop %v681
        %v746 = vtanh.pop %v682
        %v747 = vtanh.pop %v683
        %v748 = vtanh.pop %v684
        %v749 = vtanh.pop %v685
        %v750 = vtanh.pop %v686
        %v751 = vtanh.pop %v687
        %v752 = vtanh.pop %v688
        %v753 = vtanh.pop %v689
        %v754 = vtanh.pop %v690
        %v755 = vtanh.pop %v691
        %v756 = vtanh.pop %v692
        %v757 = vtanh.pop %v693
        %v758 = vtanh.pop %v694
        %v759 = vtanh.pop %v695
        %v760 = vtanh.pop %v696
        %v761 = vtanh.pop %v697
        %v762 = vtanh.pop %v698
        %v763 = vtanh.pop %v699
        %v764 = vtanh.pop %v700
        %v765 = vtanh.pop %v701
        %v766 = vtanh.pop %v702
        %v767 = vtanh.pop %v703
        %v768 = vtanh.pop %v704
        %v769 = vtanh.pop %v705
        %v770 = vtanh.pop %v706
        %v771 = vtanh.pop %v707
        %v772 = vtanh.pop %v708
        %v773 = vtanh.pop %v709
        %v774 = vtanh.pop %v710
        %v775 = vtanh.pop %v711
        %v776 = vtanh.pop %v712
        %v777 = vtanh.pop %v713
        %v778 = vtanh.pop %v714
        %v779 = vtanh.pop %v715
        %v780 = vtanh.pop %v716
        %v781 = vld [vmem:[%s4] sm:$0xff]
        %v782 = vld [vmem:[%s4 + $0x8] sm:$0xff]
        %v783 = vld [vmem:[%s4 + $0x10] sm:$0xff]
        %v784 = vld [vmem:[%s4 + $0x18] sm:$0xff]
        %v785 = vld [vmem:[%s5] sm:$0xff]
        %v786 = vld [vmem:[%s5 + $0x8] sm:$0xff]
        %v787 = vld [vmem:[%s5 + $0x10] sm:$0xff]
        %v788 = vld [vmem:[%s5 + $0x18] sm:$0xff]
        %790 = vset.pattern.permute.xlu0 0
        %791 = vperm.xlu0 %790, %v785
        %v792 = vpop.permute.xlu0 %791
        %795 = vset.pattern.permute.xlu0 0
        %796 = vperm.xlu0 %795, %v786
        %v797 = vpop.permute.xlu0 %796
        %800 = vset.pattern.permute.xlu0 0
        %801 = vperm.xlu0 %800, %v787
        %v802 = vpop.permute.xlu0 %801
        %805 = vset.pattern.permute.xlu0 0
        %806 = vperm.xlu0 %805, %v788
        %v807 = vpop.permute.xlu0 %806
        %vm809 = vcmask 261120
        %v811 = vsel %vm809, %v781, 0
        %v814 = vsel %vm809, %v782, 0
        %v817 = vsel %vm809, %v783, 0
        %v820 = vsel %vm809, %v784, 0
        %822 = vmatpush.msra.mxu0 0.0
        %823 = vmatpush.msra.mxu0 0.0
        %824 = vmatpush.msra.mxu0 0.0
        %825 = vmatpush.msra.mxu0 0.0
        %826 = vmatpush.msra.mxu0 0.0
        %827 = vmatpush.msra.mxu0 0.0
        %828 = vmatpush.msra.mxu0 0.0
        %829 = vmatpush.msra.mxu0 0.0
        %830 = vmatpush.msra.mxu0 0.0
        %831 = vmatpush.msra.mxu0 0.0
        %832 = vmatpush.msra.mxu0 0.0
        %833 = vmatpush.msra.mxu0 0.0
        %834 = vmatpush.msra.mxu0 %v765
        %835 = vmatpush.msra.mxu0 %v749
        %836 = vmatpush.msra.mxu0 %v733
        %837 = vmatpush.msra.mxu0 %v717
        %838 = vmatmul.f32.gmra.mxu0 %v811
        %v839 = vpop.f32.mrf.mxu0
        %v840 = vadd.f32 %v792, %v839
        %841 = vmatmul.f32.gmra.mxu0 %v814
        %v842 = vpop.f32.mrf.mxu0
        %v843 = vadd.f32 %v797, %v842
        %844 = vmatmul.f32.gmra.mxu0 %v817
        %v845 = vpop.f32.mrf.mxu0
        %v846 = vadd.f32 %v802, %v845
        %847 = vmatmul.f32.gmra.mxu0 %v820
        %v848 = vpop.f32.mrf.mxu0
        %v849 = vadd.f32 %v807, %v848
        %850 = vdwg.mxu0
        %851 = vmatpush.msra.mxu0 0.0
        %852 = vmatpush.msra.mxu0 0.0
        %853 = vmatpush.msra.mxu0 0.0
        %854 = vmatpush.msra.mxu0 0.0
        %855 = vmatpush.msra.mxu0 0.0
        %856 = vmatpush.msra.mxu0 0.0
        %857 = vmatpush.msra.mxu0 0.0
        %858 = vmatpush.msra.mxu0 0.0
        %859 = vmatpush.msra.mxu0 0.0
        %860 = vmatpush.msra.mxu0 0.0
        %861 = vmatpush.msra.mxu0 0.0
        %862 = vmatpush.msra.mxu0 0.0
        %863 = vmatpush.msra.mxu0 %v766
        %864 = vmatpush.msra.mxu0 %v750
        %865 = vmatpush.msra.mxu0 %v734
        %866 = vmatpush.msra.mxu0 %v718
        %867 = vmatmul.f32.gmra.mxu0 %v811
        %v868 = vpop.f32.mrf.mxu0
        %v869 = vadd.f32 %v792, %v868
        %870 = vmatmul.f32.gmra.mxu0 %v814
        %v871 = vpop.f32.mrf.mxu0
        %v872 = vadd.f32 %v797, %v871
        %873 = vmatmul.f32.gmra.mxu0 %v817
        %v874 = vpop.f32.mrf.mxu0
        %v875 = vadd.f32 %v802, %v874
        %876 = vmatmul.f32.gmra.mxu0 %v820
        %v877 = vpop.f32.mrf.mxu0
        %v878 = vadd.f32 %v807, %v877
        %879 = vdwg.mxu0
        %880 = vmatpush.msra.mxu0 0.0
        %881 = vmatpush.msra.mxu0 0.0
        %882 = vmatpush.msra.mxu0 0.0
        %883 = vmatpush.msra.mxu0 0.0
        %884 = vmatpush.msra.mxu0 0.0
        %885 = vmatpush.msra.mxu0 0.0
        %886 = vmatpush.msra.mxu0 0.0
        %887 = vmatpush.msra.mxu0 0.0
        %888 = vmatpush.msra.mxu0 0.0
        %889 = vmatpush.msra.mxu0 0.0
        %890 = vmatpush.msra.mxu0 0.0
        %891 = vmatpush.msra.mxu0 0.0
        %892 = vmatpush.msra.mxu0 %v767
        %893 = vmatpush.msra.mxu0 %v751
        %894 = vmatpush.msra.mxu0 %v735
        %895 = vmatpush.msra.mxu0 %v719
        %896 = vmatmul.f32.gmra.mxu0 %v811
        %v897 = vpop.f32.mrf.mxu0
        %v898 = vadd.f32 %v792, %v897
        %899 = vmatmul.f32.gmra.mxu0 %v814
        %v900 = vpop.f32.mrf.mxu0
        %v901 = vadd.f32 %v797, %v900
        %902 = vmatmul.f32.gmra.mxu0 %v817
        %v903 = vpop.f32.mrf.mxu0
        %v904 = vadd.f32 %v802, %v903
        %905 = vmatmul.f32.gmra.mxu0 %v820
        %v906 = vpop.f32.mrf.mxu0
        %v907 = vadd.f32 %v807, %v906
        %908 = vdwg.mxu0
        %909 = vmatpush.msra.mxu0 0.0
        %910 = vmatpush.msra.mxu0 0.0
        %911 = vmatpush.msra.mxu0 0.0
        %912 = vmatpush.msra.mxu0 0.0
        %913 = vmatpush.msra.mxu0 0.0
        %914 = vmatpush.msra.mxu0 0.0
        %915 = vmatpush.msra.mxu0 0.0
        %916 = vmatpush.msra.mxu0 0.0
        %917 = vmatpush.msra.mxu0 0.0
        %918 = vmatpush.msra.mxu0 0.0
        %919 = vmatpush.msra.mxu0 0.0
        %920 = vmatpush.msra.mxu0 0.0
        %921 = vmatpush.msra.mxu0 %v768
        %922 = vmatpush.msra.mxu0 %v752
        %923 = vmatpush.msra.mxu0 %v736
        %924 = vmatpush.msra.mxu0 %v720
        %925 = vmatmul.f32.gmra.mxu0 %v811
        %v926 = vpop.f32.mrf.mxu0
        %v927 = vadd.f32 %v792, %v926
        %928 = vmatmul.f32.gmra.mxu0 %v814
        %v929 = vpop.f32.mrf.mxu0
        %v930 = vadd.f32 %v797, %v929
        %931 = vmatmul.f32.gmra.mxu0 %v817
        %v932 = vpop.f32.mrf.mxu0
        %v933 = vadd.f32 %v802, %v932
        %934 = vmatmul.f32.gmra.mxu0 %v820
        %v935 = vpop.f32.mrf.mxu0
        %v936 = vadd.f32 %v807, %v935
        %937 = vdwg.mxu0
        %938 = vmatpush.msra.mxu0 0.0
        %939 = vmatpush.msra.mxu0 0.0
        %940 = vmatpush.msra.mxu0 0.0
        %941 = vmatpush.msra.mxu0 0.0
        %942 = vmatpush.msra.mxu0 0.0
        %943 = vmatpush.msra.mxu0 0.0
        %944 = vmatpush.msra.mxu0 0.0
        %945 = vmatpush.msra.mxu0 0.0
        %946 = vmatpush.msra.mxu0 0.0
        %947 = vmatpush.msra.mxu0 0.0
        %948 = vmatpush.msra.mxu0 0.0
        %949 = vmatpush.msra.mxu0 0.0
        %950 = vmatpush.msra.mxu0 %v769
        %951 = vmatpush.msra.mxu0 %v753
        %952 = vmatpush.msra.mxu0 %v737
        %953 = vmatpush.msra.mxu0 %v721
        %954 = vmatmul.f32.gmra.mxu0 %v811
        %v955 = vpop.f32.mrf.mxu0
        %v956 = vadd.f32 %v792, %v955
        %957 = vmatmul.f32.gmra.mxu0 %v814
        %v958 = vpop.f32.mrf.mxu0
        %v959 = vadd.f32 %v797, %v958
        %960 = vmatmul.f32.gmra.mxu0 %v817
        %v961 = vpop.f32.mrf.mxu0
        %v962 = vadd.f32 %v802, %v961
        %963 = vmatmul.f32.gmra.mxu0 %v820
        %v964 = vpop.f32.mrf.mxu0
        %v965 = vadd.f32 %v807, %v964
        %966 = vdwg.mxu0
        %967 = vmatpush.msra.mxu0 0.0
        %968 = vmatpush.msra.mxu0 0.0
        %969 = vmatpush.msra.mxu0 0.0
        %970 = vmatpush.msra.mxu0 0.0
        %971 = vmatpush.msra.mxu0 0.0
        %972 = vmatpush.msra.mxu0 0.0
        %973 = vmatpush.msra.mxu0 0.0
        %974 = vmatpush.msra.mxu0 0.0
        %975 = vmatpush.msra.mxu0 0.0
        %976 = vmatpush.msra.mxu0 0.0
        %977 = vmatpush.msra.mxu0 0.0
        %978 = vmatpush.msra.mxu0 0.0
        %979 = vmatpush.msra.mxu0 %v770
        %980 = vmatpush.msra.mxu0 %v754
        %981 = vmatpush.msra.mxu0 %v738
        %982 = vmatpush.msra.mxu0 %v722
        %983 = vmatmul.f32.gmra.mxu0 %v811
        %v984 = vpop.f32.mrf.mxu0
        %v985 = vadd.f32 %v792, %v984
        %986 = vmatmul.f32.gmra.mxu0 %v814
        %v987 = vpop.f32.mrf.mxu0
        %v988 = vadd.f32 %v797, %v987
        %989 = vmatmul.f32.gmra.mxu0 %v817
        %v990 = vpop.f32.mrf.mxu0
        %v991 = vadd.f32 %v802, %v990
        %992 = vmatmul.f32.gmra.mxu0 %v820
        %v993 = vpop.f32.mrf.mxu0
        %v994 = vadd.f32 %v807, %v993
        %995 = vdwg.mxu0
        %996 = vmatpush.msra.mxu0 0.0
        %997 = vmatpush.msra.mxu0 0.0
        %998 = vmatpush.msra.mxu0 0.0
        %999 = vmatpush.msra.mxu0 0.0
        %1000 = vmatpush.msra.mxu0 0.0
        %1001 = vmatpush.msra.mxu0 0.0
        %1002 = vmatpush.msra.mxu0 0.0
        %1003 = vmatpush.msra.mxu0 0.0
        %1004 = vmatpush.msra.mxu0 0.0
        %1005 = vmatpush.msra.mxu0 0.0
        %1006 = vmatpush.msra.mxu0 0.0
        %1007 = vmatpush.msra.mxu0 0.0
        %1008 = vmatpush.msra.mxu0 %v771
        %1009 = vmatpush.msra.mxu0 %v755
        %1010 = vmatpush.msra.mxu0 %v739
        %1011 = vmatpush.msra.mxu0 %v723
        %1012 = vmatmul.f32.gmra.mxu0 %v811
        %v1013 = vpop.f32.mrf.mxu0
        %v1014 = vadd.f32 %v792, %v1013
        %1015 = vmatmul.f32.gmra.mxu0 %v814
        %v1016 = vpop.f32.mrf.mxu0
        %v1017 = vadd.f32 %v797, %v1016
        %1018 = vmatmul.f32.gmra.mxu0 %v817
        %v1019 = vpop.f32.mrf.mxu0
        %v1020 = vadd.f32 %v802, %v1019
        %1021 = vmatmul.f32.gmra.mxu0 %v820
        %v1022 = vpop.f32.mrf.mxu0
        %v1023 = vadd.f32 %v807, %v1022
        %1024 = vdwg.mxu0
        %1025 = vmatpush.msra.mxu0 0.0
        %1026 = vmatpush.msra.mxu0 0.0
        %1027 = vmatpush.msra.mxu0 0.0
        %1028 = vmatpush.msra.mxu0 0.0
        %1029 = vmatpush.msra.mxu0 0.0
        %1030 = vmatpush.msra.mxu0 0.0
        %1031 = vmatpush.msra.mxu0 0.0
        %1032 = vmatpush.msra.mxu0 0.0
        %1033 = vmatpush.msra.mxu0 0.0
        %1034 = vmatpush.msra.mxu0 0.0
        %1035 = vmatpush.msra.mxu0 0.0
        %1036 = vmatpush.msra.mxu0 0.0
        %1037 = vmatpush.msra.mxu0 %v772
        %1038 = vmatpush.msra.mxu0 %v756
        %1039 = vmatpush.msra.mxu0 %v740
        %1040 = vmatpush.msra.mxu0 %v724
        %1041 = vmatmul.f32.gmra.mxu0 %v811
        %v1042 = vpop.f32.mrf.mxu0
        %v1043 = vadd.f32 %v792, %v1042
        %1044 = vmatmul.f32.gmra.mxu0 %v814
        %v1045 = vpop.f32.mrf.mxu0
        %v1046 = vadd.f32 %v797, %v1045
        %1047 = vmatmul.f32.gmra.mxu0 %v817
        %v1048 = vpop.f32.mrf.mxu0
        %v1049 = vadd.f32 %v802, %v1048
        %1050 = vmatmul.f32.gmra.mxu0 %v820
        %v1051 = vpop.f32.mrf.mxu0
        %v1052 = vadd.f32 %v807, %v1051
        %1053 = vdwg.mxu0
        %1054 = vmatpush.msra.mxu0 0.0
        %1055 = vmatpush.msra.mxu0 0.0
        %1056 = vmatpush.msra.mxu0 0.0
        %1057 = vmatpush.msra.mxu0 0.0
        %1058 = vmatpush.msra.mxu0 0.0
        %1059 = vmatpush.msra.mxu0 0.0
        %1060 = vmatpush.msra.mxu0 0.0
        %1061 = vmatpush.msra.mxu0 0.0
        %1062 = vmatpush.msra.mxu0 0.0
        %1063 = vmatpush.msra.mxu0 0.0
        %1064 = vmatpush.msra.mxu0 0.0
        %1065 = vmatpush.msra.mxu0 0.0
        %1066 = vmatpush.msra.mxu0 %v773
        %1067 = vmatpush.msra.mxu0 %v757
        %1068 = vmatpush.msra.mxu0 %v741
        %1069 = vmatpush.msra.mxu0 %v725
        %1070 = vmatmul.f32.gmra.mxu0 %v811
        %v1071 = vpop.f32.mrf.mxu0
        %v1072 = vadd.f32 %v792, %v1071
        %1073 = vmatmul.f32.gmra.mxu0 %v814
        %v1074 = vpop.f32.mrf.mxu0
        %v1075 = vadd.f32 %v797, %v1074
        %1076 = vmatmul.f32.gmra.mxu0 %v817
        %v1077 = vpop.f32.mrf.mxu0
        %v1078 = vadd.f32 %v802, %v1077
        %1079 = vmatmul.f32.gmra.mxu0 %v820
        %v1080 = vpop.f32.mrf.mxu0
        %v1081 = vadd.f32 %v807, %v1080
        %1082 = vdwg.mxu0
        %1083 = vmatpush.msra.mxu0 0.0
        %1084 = vmatpush.msra.mxu0 0.0
        %1085 = vmatpush.msra.mxu0 0.0
        %1086 = vmatpush.msra.mxu0 0.0
        %1087 = vmatpush.msra.mxu0 0.0
        %1088 = vmatpush.msra.mxu0 0.0
        %1089 = vmatpush.msra.mxu0 0.0
        %1090 = vmatpush.msra.mxu0 0.0
        %1091 = vmatpush.msra.mxu0 0.0
        %1092 = vmatpush.msra.mxu0 0.0
        %1093 = vmatpush.msra.mxu0 0.0
        %1094 = vmatpush.msra.mxu0 0.0
        %1095 = vmatpush.msra.mxu0 %v774
        %1096 = vmatpush.msra.mxu0 %v758
        %1097 = vmatpush.msra.mxu0 %v742
        %1098 = vmatpush.msra.mxu0 %v726
        %1099 = vmatmul.f32.gmra.mxu0 %v811
        %v1100 = vpop.f32.mrf.mxu0
        %v1101 = vadd.f32 %v792, %v1100
        %1102 = vmatmul.f32.gmra.mxu0 %v814
        %v1103 = vpop.f32.mrf.mxu0
        %v1104 = vadd.f32 %v797, %v1103
        %1105 = vmatmul.f32.gmra.mxu0 %v817
        %v1106 = vpop.f32.mrf.mxu0
        %v1107 = vadd.f32 %v802, %v1106
        %1108 = vmatmul.f32.gmra.mxu0 %v820
        %v1109 = vpop.f32.mrf.mxu0
        %v1110 = vadd.f32 %v807, %v1109
        %1111 = vdwg.mxu0
        %1112 = vmatpush.msra.mxu0 0.0
        %1113 = vmatpush.msra.mxu0 0.0
        %1114 = vmatpush.msra.mxu0 0.0
        %1115 = vmatpush.msra.mxu0 0.0
        %1116 = vmatpush.msra.mxu0 0.0
        %1117 = vmatpush.msra.mxu0 0.0
        %1118 = vmatpush.msra.mxu0 0.0
        %1119 = vmatpush.msra.mxu0 0.0
        %1120 = vmatpush.msra.mxu0 0.0
        %1121 = vmatpush.msra.mxu0 0.0
        %1122 = vmatpush.msra.mxu0 0.0
        %1123 = vmatpush.msra.mxu0 0.0
        %1124 = vmatpush.msra.mxu0 %v775
        %1125 = vmatpush.msra.mxu0 %v759
        %1126 = vmatpush.msra.mxu0 %v743
        %1127 = vmatpush.msra.mxu0 %v727
        %1128 = vmatmul.f32.gmra.mxu0 %v811
        %v1129 = vpop.f32.mrf.mxu0
        %v1130 = vadd.f32 %v792, %v1129
        %1131 = vmatmul.f32.gmra.mxu0 %v814
        %v1132 = vpop.f32.mrf.mxu0
        %v1133 = vadd.f32 %v797, %v1132
        %1134 = vmatmul.f32.gmra.mxu0 %v817
        %v1135 = vpop.f32.mrf.mxu0
        %v1136 = vadd.f32 %v802, %v1135
        %1137 = vmatmul.f32.gmra.mxu0 %v820
        %v1138 = vpop.f32.mrf.mxu0
        %v1139 = vadd.f32 %v807, %v1138
        %1140 = vdwg.mxu0
        %1141 = vmatpush.msra.mxu0 0.0
        %1142 = vmatpush.msra.mxu0 0.0
        %1143 = vmatpush.msra.mxu0 0.0
        %1144 = vmatpush.msra.mxu0 0.0
        %1145 = vmatpush.msra.mxu0 0.0
        %1146 = vmatpush.msra.mxu0 0.0
        %1147 = vmatpush.msra.mxu0 0.0
        %1148 = vmatpush.msra.mxu0 0.0
        %1149 = vmatpush.msra.mxu0 0.0
        %1150 = vmatpush.msra.mxu0 0.0
        %1151 = vmatpush.msra.mxu0 0.0
        %1152 = vmatpush.msra.mxu0 0.0
        %1153 = vmatpush.msra.mxu0 %v776
        %1154 = vmatpush.msra.mxu0 %v760
        %1155 = vmatpush.msra.mxu0 %v744
        %1156 = vmatpush.msra.mxu0 %v728
        %1157 = vmatmul.f32.gmra.mxu0 %v811
        %v1158 = vpop.f32.mrf.mxu0
        %v1159 = vadd.f32 %v792, %v1158
        %1160 = vmatmul.f32.gmra.mxu0 %v814
        %v1161 = vpop.f32.mrf.mxu0
        %v1162 = vadd.f32 %v797, %v1161
        %1163 = vmatmul.f32.gmra.mxu0 %v817
        %v1164 = vpop.f32.mrf.mxu0
        %v1165 = vadd.f32 %v802, %v1164
        %1166 = vmatmul.f32.gmra.mxu0 %v820
        %v1167 = vpop.f32.mrf.mxu0
        %v1168 = vadd.f32 %v807, %v1167
        %1169 = vdwg.mxu0
        %1170 = vmatpush.msra.mxu0 0.0
        %1171 = vmatpush.msra.mxu0 0.0
        %1172 = vmatpush.msra.mxu0 0.0
        %1173 = vmatpush.msra.mxu0 0.0
        %1174 = vmatpush.msra.mxu0 0.0
        %1175 = vmatpush.msra.mxu0 0.0
        %1176 = vmatpush.msra.mxu0 0.0
        %1177 = vmatpush.msra.mxu0 0.0
        %1178 = vmatpush.msra.mxu0 0.0
        %1179 = vmatpush.msra.mxu0 0.0
        %1180 = vmatpush.msra.mxu0 0.0
        %1181 = vmatpush.msra.mxu0 0.0
        %1182 = vmatpush.msra.mxu0 %v777
        %1183 = vmatpush.msra.mxu0 %v761
        %1184 = vmatpush.msra.mxu0 %v745
        %1185 = vmatpush.msra.mxu0 %v729
        %1186 = vmatmul.f32.gmra.mxu0 %v811
        %v1187 = vpop.f32.mrf.mxu0
        %v1188 = vadd.f32 %v792, %v1187
        %1189 = vmatmul.f32.gmra.mxu0 %v814
        %v1190 = vpop.f32.mrf.mxu0
        %v1191 = vadd.f32 %v797, %v1190
        %1192 = vmatmul.f32.gmra.mxu0 %v817
        %v1193 = vpop.f32.mrf.mxu0
        %v1194 = vadd.f32 %v802, %v1193
        %1195 = vmatmul.f32.gmra.mxu0 %v820
        %v1196 = vpop.f32.mrf.mxu0
        %v1197 = vadd.f32 %v807, %v1196
        %1198 = vdwg.mxu0
        %1199 = vmatpush.msra.mxu0 0.0
        %1200 = vmatpush.msra.mxu0 0.0
        %1201 = vmatpush.msra.mxu0 0.0
        %1202 = vmatpush.msra.mxu0 0.0
        %1203 = vmatpush.msra.mxu0 0.0
        %1204 = vmatpush.msra.mxu0 0.0
        %1205 = vmatpush.msra.mxu0 0.0
        %1206 = vmatpush.msra.mxu0 0.0
        %1207 = vmatpush.msra.mxu0 0.0
        %1208 = vmatpush.msra.mxu0 0.0
        %1209 = vmatpush.msra.mxu0 0.0
        %1210 = vmatpush.msra.mxu0 0.0
        %1211 = vmatpush.msra.mxu0 %v778
        %1212 = vmatpush.msra.mxu0 %v762
        %1213 = vmatpush.msra.mxu0 %v746
        %1214 = vmatpush.msra.mxu0 %v730
        %1215 = vmatmul.f32.gmra.mxu0 %v811
        %v1216 = vpop.f32.mrf.mxu0
        %v1217 = vadd.f32 %v792, %v1216
        %1218 = vmatmul.f32.gmra.mxu0 %v814
        %v1219 = vpop.f32.mrf.mxu0
        %v1220 = vadd.f32 %v797, %v1219
        %1221 = vmatmul.f32.gmra.mxu0 %v817
        %v1222 = vpop.f32.mrf.mxu0
        %v1223 = vadd.f32 %v802, %v1222
        %1224 = vmatmul.f32.gmra.mxu0 %v820
        %v1225 = vpop.f32.mrf.mxu0
        %v1226 = vadd.f32 %v807, %v1225
        %1227 = vdwg.mxu0
        %1228 = vmatpush.msra.mxu0 0.0
        %1229 = vmatpush.msra.mxu0 0.0
        %1230 = vmatpush.msra.mxu0 0.0
        %1231 = vmatpush.msra.mxu0 0.0
        %1232 = vmatpush.msra.mxu0 0.0
        %1233 = vmatpush.msra.mxu0 0.0
        %1234 = vmatpush.msra.mxu0 0.0
        %1235 = vmatpush.msra.mxu0 0.0
        %1236 = vmatpush.msra.mxu0 0.0
        %1237 = vmatpush.msra.mxu0 0.0
        %1238 = vmatpush.msra.mxu0 0.0
        %1239 = vmatpush.msra.mxu0 0.0
        %1240 = vmatpush.msra.mxu0 %v779
        %1241 = vmatpush.msra.mxu0 %v763
        %1242 = vmatpush.msra.mxu0 %v747
        %1243 = vmatpush.msra.mxu0 %v731
        %1244 = vmatmul.f32.gmra.mxu0 %v811
        %v1245 = vpop.f32.mrf.mxu0
        %v1246 = vadd.f32 %v792, %v1245
        %1247 = vmatmul.f32.gmra.mxu0 %v814
        %v1248 = vpop.f32.mrf.mxu0
        %v1249 = vadd.f32 %v797, %v1248
        %1250 = vmatmul.f32.gmra.mxu0 %v817
        %v1251 = vpop.f32.mrf.mxu0
        %v1252 = vadd.f32 %v802, %v1251
        %1253 = vmatmul.f32.gmra.mxu0 %v820
        %v1254 = vpop.f32.mrf.mxu0
        %v1255 = vadd.f32 %v807, %v1254
        %1256 = vdwg.mxu0
        %1257 = vmatpush.msra.mxu0 0.0
        %1258 = vmatpush.msra.mxu0 0.0
        %1259 = vmatpush.msra.mxu0 0.0
        %1260 = vmatpush.msra.mxu0 0.0
        %1261 = vmatpush.msra.mxu0 0.0
        %1262 = vmatpush.msra.mxu0 0.0
        %1263 = vmatpush.msra.mxu0 0.0
        %1264 = vmatpush.msra.mxu0 0.0
        %1265 = vmatpush.msra.mxu0 0.0
        %1266 = vmatpush.msra.mxu0 0.0
        %1267 = vmatpush.msra.mxu0 0.0
        %1268 = vmatpush.msra.mxu0 0.0
        %1269 = vmatpush.msra.mxu0 %v780
        %1270 = vmatpush.msra.mxu0 %v764
        %1271 = vmatpush.msra.mxu0 %v748
        %1272 = vmatpush.msra.mxu0 %v732
        %1273 = vmatmul.f32.gmra.mxu0 %v811
        %v1274 = vpop.f32.mrf.mxu0
        %v1275 = vadd.f32 %v792, %v1274
        %1276 = vmatmul.f32.gmra.mxu0 %v814
        %v1277 = vpop.f32.mrf.mxu0
        %v1278 = vadd.f32 %v797, %v1277
        %1279 = vmatmul.f32.gmra.mxu0 %v817
        %v1280 = vpop.f32.mrf.mxu0
        %v1281 = vadd.f32 %v802, %v1280
        %1282 = vmatmul.f32.gmra.mxu0 %v820
        %v1283 = vpop.f32.mrf.mxu0
        %v1284 = vadd.f32 %v807, %v1283
        %1285 = vdwg.mxu0
        %v1286 = vtanh.pop %v840
        %v1287 = vtanh.pop %v869
        %v1288 = vtanh.pop %v898
        %v1289 = vtanh.pop %v927
        %v1290 = vtanh.pop %v956
        %v1291 = vtanh.pop %v985
        %v1292 = vtanh.pop %v1014
        %v1293 = vtanh.pop %v1043
        %v1294 = vtanh.pop %v1072
        %v1295 = vtanh.pop %v1101
        %v1296 = vtanh.pop %v1130
        %v1297 = vtanh.pop %v1159
        %v1298 = vtanh.pop %v1188
        %v1299 = vtanh.pop %v1217
        %v1300 = vtanh.pop %v1246
        %v1301 = vtanh.pop %v1275
        %v1302 = vtanh.pop %v843
        %v1303 = vtanh.pop %v872
        %v1304 = vtanh.pop %v901
        %v1305 = vtanh.pop %v930
        %v1306 = vtanh.pop %v959
        %v1307 = vtanh.pop %v988
        %v1308 = vtanh.pop %v1017
        %v1309 = vtanh.pop %v1046
        %v1310 = vtanh.pop %v1075
        %v1311 = vtanh.pop %v1104
        %v1312 = vtanh.pop %v1133
        %v1313 = vtanh.pop %v1162
        %v1314 = vtanh.pop %v1191
        %v1315 = vtanh.pop %v1220
        %v1316 = vtanh.pop %v1249
        %v1317 = vtanh.pop %v1278
        %v1318 = vtanh.pop %v846
        %v1319 = vtanh.pop %v875
        %v1320 = vtanh.pop %v904
        %v1321 = vtanh.pop %v933
        %v1322 = vtanh.pop %v962
        %v1323 = vtanh.pop %v991
        %v1324 = vtanh.pop %v1020
        %v1325 = vtanh.pop %v1049
        %v1326 = vtanh.pop %v1078
        %v1327 = vtanh.pop %v1107
        %v1328 = vtanh.pop %v1136
        %v1329 = vtanh.pop %v1165
        %v1330 = vtanh.pop %v1194
        %v1331 = vtanh.pop %v1223
        %v1332 = vtanh.pop %v1252
        %v1333 = vtanh.pop %v1281
        %v1334 = vtanh.pop %v849
        %v1335 = vtanh.pop %v878
        %v1336 = vtanh.pop %v907
        %v1337 = vtanh.pop %v936
        %v1338 = vtanh.pop %v965
        %v1339 = vtanh.pop %v994
        %v1340 = vtanh.pop %v1023
        %v1341 = vtanh.pop %v1052
        %v1342 = vtanh.pop %v1081
        %v1343 = vtanh.pop %v1110
        %v1344 = vtanh.pop %v1139
        %v1345 = vtanh.pop %v1168
        %v1346 = vtanh.pop %v1197
        %v1347 = vtanh.pop %v1226
        %v1348 = vtanh.pop %v1255
        %v1349 = vtanh.pop %v1284
        %v1350 = vld [vmem:[%s6] sm:$0xff]
        %v1351 = vld [vmem:[%s6 + $0x8] sm:$0xff]
        %v1352 = vld [vmem:[%s6 + $0x10] sm:$0xff]
        %v1353 = vld [vmem:[%s6 + $0x18] sm:$0xff]
        %v1354 = vld [vmem:[#allocation2] sm:$0x1]
        %1356 = vset.pattern.permute.xlu0 0
        %1357 = vperm.xlu0 %1356, %v1350
        %v1358 = vpop.permute.xlu0 %1357
        %1361 = vset.pattern.permute.xlu0 0
        %1362 = vperm.xlu0 %1361, %v1351
        %v1363 = vpop.permute.xlu0 %1362
        %1366 = vset.pattern.permute.xlu0 0
        %1367 = vperm.xlu0 %1366, %v1352
        %v1368 = vpop.permute.xlu0 %1367
        %1371 = vset.pattern.permute.xlu0 0
        %1372 = vperm.xlu0 %1371, %v1353
        %v1373 = vpop.permute.xlu0 %1372
        %v1375 = vmul.f32 %v1358, %v1286
        %v1376 = vmul.f32 %v1358, %v1287
        %v1377 = vmul.f32 %v1358, %v1288
        %v1378 = vmul.f32 %v1358, %v1289
        %v1379 = vmul.f32 %v1358, %v1290
        %v1380 = vmul.f32 %v1358, %v1291
        %v1381 = vmul.f32 %v1358, %v1292
        %v1382 = vmul.f32 %v1358, %v1293
        %v1383 = vmul.f32 %v1358, %v1294
        %v1384 = vmul.f32 %v1358, %v1295
        %v1385 = vmul.f32 %v1358, %v1296
        %v1386 = vmul.f32 %v1358, %v1297
        %v1387 = vmul.f32 %v1358, %v1298
        %v1388 = vmul.f32 %v1358, %v1299
        %v1389 = vmul.f32 %v1358, %v1300
        %v1390 = vmul.f32 %v1358, %v1301
        %v1391 = vmul.f32 %v1363, %v1302
        %v1392 = vmul.f32 %v1363, %v1303
        %v1393 = vmul.f32 %v1363, %v1304
        %v1394 = vmul.f32 %v1363, %v1305
        %v1395 = vmul.f32 %v1363, %v1306
        %v1396 = vmul.f32 %v1363, %v1307
        %v1397 = vmul.f32 %v1363, %v1308
        %v1398 = vmul.f32 %v1363, %v1309
        %v1399 = vmul.f32 %v1363, %v1310
        %v1400 = vmul.f32 %v1363, %v1311
        %v1401 = vmul.f32 %v1363, %v1312
        %v1402 = vmul.f32 %v1363, %v1313
        %v1403 = vmul.f32 %v1363, %v1314
        %v1404 = vmul.f32 %v1363, %v1315
        %v1405 = vmul.f32 %v1363, %v1316
        %v1406 = vmul.f32 %v1363, %v1317
        %v1407 = vmul.f32 %v1368, %v1318
        %v1408 = vmul.f32 %v1368, %v1319
        %v1409 = vmul.f32 %v1368, %v1320
        %v1410 = vmul.f32 %v1368, %v1321
        %v1411 = vmul.f32 %v1368, %v1322
        %v1412 = vmul.f32 %v1368, %v1323
        %v1413 = vmul.f32 %v1368, %v1324
        %v1414 = vmul.f32 %v1368, %v1325
        %v1415 = vmul.f32 %v1368, %v1326
        %v1416 = vmul.f32 %v1368, %v1327
        %v1417 = vmul.f32 %v1368, %v1328
        %v1418 = vmul.f32 %v1368, %v1329
        %v1419 = vmul.f32 %v1368, %v1330
        %v1420 = vmul.f32 %v1368, %v1331
        %v1421 = vmul.f32 %v1368, %v1332
        %v1422 = vmul.f32 %v1368, %v1333
        %v1423 = vmul.f32 %v1373, %v1334
        %v1424 = vmul.f32 %v1373, %v1335
        %v1425 = vmul.f32 %v1373, %v1336
        %v1426 = vmul.f32 %v1373, %v1337
        %v1427 = vmul.f32 %v1373, %v1338
        %v1428 = vmul.f32 %v1373, %v1339
        %v1429 = vmul.f32 %v1373, %v1340
        %v1430 = vmul.f32 %v1373, %v1341
        %v1431 = vmul.f32 %v1373, %v1342
        %v1432 = vmul.f32 %v1373, %v1343
        %v1433 = vmul.f32 %v1373, %v1344
        %v1434 = vmul.f32 %v1373, %v1345
        %v1435 = vmul.f32 %v1373, %v1346
        %v1436 = vmul.f32 %v1373, %v1347
        %v1437 = vmul.f32 %v1373, %v1348
        %v1438 = vmul.f32 %v1373, %v1349
        %v1439 = vadd.f32 %v1375, %v1391
        %v1440 = vadd.f32 %v1439, %v1407
        %v1441 = vadd.f32 %v1440, %v1423
        %v1442 = vrot.slane %v1441, 4
        %v1443 = vadd.f32 %v1441, %v1442
        %v1444 = vrot.slane %v1443, 2
        %v1445 = vadd.f32 %v1443, %v1444
        %v1446 = vrot.slane %v1445, 1
        %v1447 = vadd.f32 %v1445, %v1446
        %v1448 = vadd.f32 %v1376, %v1392
        %v1449 = vadd.f32 %v1448, %v1408
        %v1450 = vadd.f32 %v1449, %v1424
        %v1451 = vrot.slane %v1450, 4
        %v1452 = vadd.f32 %v1450, %v1451
        %v1453 = vrot.slane %v1452, 2
        %v1454 = vadd.f32 %v1452, %v1453
        %v1455 = vrot.slane %v1454, 1
        %v1456 = vadd.f32 %v1454, %v1455
        %v1457 = vadd.f32 %v1377, %v1393
        %v1458 = vadd.f32 %v1457, %v1409
        %v1459 = vadd.f32 %v1458, %v1425
        %v1460 = vrot.slane %v1459, 4
        %v1461 = vadd.f32 %v1459, %v1460
        %v1462 = vrot.slane %v1461, 2
        %v1463 = vadd.f32 %v1461, %v1462
        %v1464 = vrot.slane %v1463, 1
        %v1465 = vadd.f32 %v1463, %v1464
        %v1466 = vadd.f32 %v1378, %v1394
        %v1467 = vadd.f32 %v1466, %v1410
        %v1468 = vadd.f32 %v1467, %v1426
        %v1469 = vrot.slane %v1468, 4
        %v1470 = vadd.f32 %v1468, %v1469
        %v1471 = vrot.slane %v1470, 2
        %v1472 = vadd.f32 %v1470, %v1471
        %v1473 = vrot.slane %v1472, 1
        %v1474 = vadd.f32 %v1472, %v1473
        %v1475 = vadd.f32 %v1379, %v1395
        %v1476 = vadd.f32 %v1475, %v1411
        %v1477 = vadd.f32 %v1476, %v1427
        %v1478 = vrot.slane %v1477, 4
        %v1479 = vadd.f32 %v1477, %v1478
        %v1480 = vrot.slane %v1479, 2
        %v1481 = vadd.f32 %v1479, %v1480
        %v1482 = vrot.slane %v1481, 1
        %v1483 = vadd.f32 %v1481, %v1482
        %v1484 = vadd.f32 %v1380, %v1396
        %v1485 = vadd.f32 %v1484, %v1412
        %v1486 = vadd.f32 %v1485, %v1428
        %v1487 = vrot.slane %v1486, 4
        %v1488 = vadd.f32 %v1486, %v1487
        %v1489 = vrot.slane %v1488, 2
        %v1490 = vadd.f32 %v1488, %v1489
        %v1491 = vrot.slane %v1490, 1
        %v1492 = vadd.f32 %v1490, %v1491
        %v1493 = vadd.f32 %v1381, %v1397
        %v1494 = vadd.f32 %v1493, %v1413
        %v1495 = vadd.f32 %v1494, %v1429
        %v1496 = vrot.slane %v1495, 4
        %v1497 = vadd.f32 %v1495, %v1496
        %v1498 = vrot.slane %v1497, 2
        %v1499 = vadd.f32 %v1497, %v1498
        %v1500 = vrot.slane %v1499, 1
        %v1501 = vadd.f32 %v1499, %v1500
        %v1502 = vadd.f32 %v1382, %v1398
        %v1503 = vadd.f32 %v1502, %v1414
        %v1504 = vadd.f32 %v1503, %v1430
        %v1505 = vrot.slane %v1504, 4
        %v1506 = vadd.f32 %v1504, %v1505
        %v1507 = vrot.slane %v1506, 2
        %v1508 = vadd.f32 %v1506, %v1507
        %v1509 = vrot.slane %v1508, 1
        %v1510 = vadd.f32 %v1508, %v1509
        %v1511 = vadd.f32 %v1383, %v1399
        %v1512 = vadd.f32 %v1511, %v1415
        %v1513 = vadd.f32 %v1512, %v1431
        %v1514 = vrot.slane %v1513, 4
        %v1515 = vadd.f32 %v1513, %v1514
        %v1516 = vrot.slane %v1515, 2
        %v1517 = vadd.f32 %v1515, %v1516
        %v1518 = vrot.slane %v1517, 1
        %v1519 = vadd.f32 %v1517, %v1518
        %v1520 = vadd.f32 %v1384, %v1400
        %v1521 = vadd.f32 %v1520, %v1416
        %v1522 = vadd.f32 %v1521, %v1432
        %v1523 = vrot.slane %v1522, 4
        %v1524 = vadd.f32 %v1522, %v1523
        %v1525 = vrot.slane %v1524, 2
        %v1526 = vadd.f32 %v1524, %v1525
        %v1527 = vrot.slane %v1526, 1
        %v1528 = vadd.f32 %v1526, %v1527
        %v1529 = vadd.f32 %v1385, %v1401
        %v1530 = vadd.f32 %v1529, %v1417
        %v1531 = vadd.f32 %v1530, %v1433
        %v1532 = vrot.slane %v1531, 4
        %v1533 = vadd.f32 %v1531, %v1532
        %v1534 = vrot.slane %v1533, 2
        %v1535 = vadd.f32 %v1533, %v1534
        %v1536 = vrot.slane %v1535, 1
        %v1537 = vadd.f32 %v1535, %v1536
        %v1538 = vadd.f32 %v1386, %v1402
        %v1539 = vadd.f32 %v1538, %v1418
        %v1540 = vadd.f32 %v1539, %v1434
        %v1541 = vrot.slane %v1540, 4
        %v1542 = vadd.f32 %v1540, %v1541
        %v1543 = vrot.slane %v1542, 2
        %v1544 = vadd.f32 %v1542, %v1543
        %v1545 = vrot.slane %v1544, 1
        %v1546 = vadd.f32 %v1544, %v1545
        %v1547 = vadd.f32 %v1387, %v1403
        %v1548 = vadd.f32 %v1547, %v1419
        %v1549 = vadd.f32 %v1548, %v1435
        %v1550 = vrot.slane %v1549, 4
        %v1551 = vadd.f32 %v1549, %v1550
        %v1552 = vrot.slane %v1551, 2
        %v1553 = vadd.f32 %v1551, %v1552
        %v1554 = vrot.slane %v1553, 1
        %v1555 = vadd.f32 %v1553, %v1554
        %v1556 = vadd.f32 %v1388, %v1404
        %v1557 = vadd.f32 %v1556, %v1420
        %v1558 = vadd.f32 %v1557, %v1436
        %v1559 = vrot.slane %v1558, 4
        %v1560 = vadd.f32 %v1558, %v1559
        %v1561 = vrot.slane %v1560, 2
        %v1562 = vadd.f32 %v1560, %v1561
        %v1563 = vrot.slane %v1562, 1
        %v1564 = vadd.f32 %v1562, %v1563
        %v1565 = vadd.f32 %v1389, %v1405
        %v1566 = vadd.f32 %v1565, %v1421
        %v1567 = vadd.f32 %v1566, %v1437
        %v1568 = vrot.slane %v1567, 4
        %v1569 = vadd.f32 %v1567, %v1568
        %v1570 = vrot.slane %v1569, 2
        %v1571 = vadd.f32 %v1569, %v1570
        %v1572 = vrot.slane %v1571, 1
        %v1573 = vadd.f32 %v1571, %v1572
        %v1574 = vadd.f32 %v1390, %v1406
        %v1575 = vadd.f32 %v1574, %v1422
        %v1576 = vadd.f32 %v1575, %v1438
        %v1577 = vrot.slane %v1576, 4
        %v1578 = vadd.f32 %v1576, %v1577
        %v1579 = vrot.slane %v1578, 2
        %v1580 = vadd.f32 %v1578, %v1579
        %v1581 = vrot.slane %v1580, 1
        %v1582 = vadd.f32 %v1580, %v1581
        %1584 = vset.pattern.permute.xlu0 0
        %1585 = vperm.xlu0 %1584, %v1354
        %v1586 = vpop.permute.xlu0 %1585
        %v1588 = vperm.slane %v1586, 0
        %v1589 = vadd.f32 %v1447, %v1588
        %v1590 = vadd.f32 %v1456, %v1588
        %v1591 = vadd.f32 %v1465, %v1588
        %v1592 = vadd.f32 %v1474, %v1588
        %v1593 = vadd.f32 %v1483, %v1588
        %v1594 = vadd.f32 %v1492, %v1588
        %v1595 = vadd.f32 %v1501, %v1588
        %v1596 = vadd.f32 %v1510, %v1588
        %v1597 = vadd.f32 %v1519, %v1588
        %v1598 = vadd.f32 %v1528, %v1588
        %v1599 = vadd.f32 %v1537, %v1588
        %v1600 = vadd.f32 %v1546, %v1588
        %v1601 = vadd.f32 %v1555, %v1588
        %v1602 = vadd.f32 %v1564, %v1588
        %v1603 = vadd.f32 %v1573, %v1588
        %v1604 = vadd.f32 %v1582, %v1588
        %v1621 = vrot.slane %v1590, 7
        %v1622 = vrot.slane %v1591, 6
        %v1623 = vrot.slane %v1592, 5
        %v1624 = vrot.slane %v1593, 4
        %v1625 = vrot.slane %v1594, 3
        %v1626 = vrot.slane %v1595, 2
        %v1627 = vrot.slane %v1596, 1
        %v1628 = vrot.slane %v1598, 7
        %v1629 = vrot.slane %v1599, 6
        %v1630 = vrot.slane %v1600, 5
        %v1631 = vrot.slane %v1601, 4
        %v1632 = vrot.slane %v1602, 3
        %v1633 = vrot.slane %v1603, 2
        %v1634 = vrot.slane %v1604, 1
        %vm1635 = vcmask 1040384
        %v1636 = vsel %vm1635, %v1589, %v1621
        %vm1637 = vcmask 1042434
        %v1638 = vsel %vm1637, %v1622, %v1623
        %vm1639 = vcmask 1041408
        %v1640 = vsel %vm1639, %v1636, %v1638
        %vm1641 = vcmask 1044484
        %v1642 = vsel %vm1641, %v1624, %v1625
        %vm1643 = vcmask 1046534
        %v1644 = vsel %vm1643, %v1626, %v1627
        %vm1645 = vcmask 1045508
        %v1646 = vsel %vm1645, %v1642, %v1644
        %vm1647 = vcmask 1043456
        %v1648 = vsel %vm1647, %v1640, %v1646
        %v1649 = vsel %vm1635, %v1597, %v1628
        %v1650 = vsel %vm1637, %v1629, %v1630
        %v1651 = vsel %vm1639, %v1649, %v1650
        %v1652 = vsel %vm1641, %v1631, %v1632
        %v1653 = vsel %vm1643, %v1633, %v1634
        %v1654 = vsel %vm1645, %v1652, %v1653
        %v1655 = vsel %vm1647, %v1651, %v1654
        %1658 = vst [vmem:[%s313] sm:$0xff] %v1648
        %1659 = vst [vmem:[%s313 + $0x8] sm:$0xff] %v1655
        %s1660 = sand.u32 %s210, 1
        %s1661 = scalar_lea.sflag [#allocation4], %s1660
        %s1662 = sand.u32 %s210, 1
        %s1663 = smul.addr %s1662, 16
        %s1664 = scalar_lea.vmem [#allocation3], %s1663
        // Predicated region
        $region53: #{tpu_custom_call.1} parent=51 // pred_check
          %p1665 = pneg %p220
        $region54: #{tpu_custom_call.1} parent=51 // pred_check_branch
          %1667 = sbr.rel (%p1665) target = $region56
        $region55: #{tpu_custom_call.1} parent=51 // pred_region
          %s1668 = smul.u32 16, %s24
          %1670 = vsyncadd %s1661, 0
          %s1671 = scalar_lea.hbm %s8, %s1668
          %s1673 = sshll.u32 %s1664, 4
          %s1674 = int_to_ptr.vmem [resolvable:$true] %s1673
          %s1675 = sshll.u32 %s1671, 4
          %s1676 = int_to_ptr.hbm [resolvable:$true] %s1675
          %1678 = dma.vmem_to_hbm [thread:$0]  %s1674, 256, %s1676, %s1661
        $region56: #{tpu_custom_call.1} parent=51 // pred_fallthru
          _
      $region52: #{tpu_custom_call.1} parent=5 // pred_fallthru
        _
      %p1679 = scmp.le.s32.totalorder 2, %s19
      // Predicated region
      $region57: #{tpu_custom_call.1} parent=5 // pred_check
        %p1680 = pneg %p1679
      $region58: #{tpu_custom_call.1} parent=5 // pred_check_branch
        %1682 = sbr.rel (%p1680) target = $region60
      $region59: #{tpu_custom_call.1} parent=5 // pred_region
        %s1683 = ssub.s32 %s19, 2
        // Predicated region
        $region61: #{tpu_custom_call.1} parent=59 // pred_check
          %p1684 = pneg %p226
        $region62: #{tpu_custom_call.1} parent=59 // pred_check_branch
          %1686 = sbr.rel (%p1684) target = $region64
        $region63: #{tpu_custom_call.1} parent=59 // pred_region
          %s1687 = sand.u32 %s211, 1
          %s1688 = scalar_lea.sflag [#allocation4], %s1687
          %s1689 = sand.u32 %s211, 1
          %s1690 = smul.addr %s1689, 16
          %s1691 = scalar_lea.vmem [#allocation3], %s1690
          %1693 = dma.done %s1688, 256
        $region64: #{tpu_custom_call.1} parent=59 // pred_fallthru
          _
      $region60: #{tpu_custom_call.1} parent=5 // pred_fallthru
        _
    $region6: #{tpu_custom_call.1} parent=1 // loop_footer
      %s23 = sadd.s32 1, %s19
    $region7: #{tpu_custom_call.1} parent=1 // loop_footer_branch
      %18 = sbr.rel target = $region3
    $region8: #{tpu_custom_call.1} parent=1 // loop_exit
      _
    %1694 = vsyncpa [#allocation4], 1
    %s1695 = scalar_lea.sflag [#allocation4], 1
    %1696 = vsyncpa %s1695, 1

</llo_original>
